<compile_context>
chip_gen: v5e
topology: v5e:2x2
jax: 0.10.0
libtpu: 0.0.40
codegen_flags: <defaults>
</compile_context>

<pallas_src>
import jax
import jax.numpy as jnp
from jax import lax
from jax.experimental import pallas as pl
from jax.experimental.pallas import tpu as pltpu


def _round_up(x, m):
    return (x + m - 1) // m * m


def _pad_to(a, shape):
    return jnp.pad(a, [(0, s - d) for s, d in zip(shape, a.shape)])


def _num_tensorcores_per_chip():
    """2 on megacore-style chips (v7x, v4), else 1 (v5e / v6e)."""
    try:
        kind = jax.devices()[0].device_kind.lower()
    except Exception:
        return 1
    return 2 if ("v7" in kind or "v4" in kind) else 1


def _pick_tile(dim, candidates):
    for c in candidates:
        if dim % c == 0:
            return c
    return dim


# ---------------------------------------------------------------------------
# Kernel 1: recurrence.  TT timesteps per grid step; hidden state carried in VMEM.
# ---------------------------------------------------------------------------
def _recurrence_kernel(emb_ref, whh_ref, hout_ref, h_ref):
    """emb_ref : (TT, BBLK, H_pad) f32  pre-gathered W_xh[x_t] + b_h (time-major block)
    whh_ref : (H_pad, H_pad)    f32  resident recurrent weights
    hout_ref: (BBLK, TT, H_pad) f32  batch-major hidden-state output block
    h_ref   : (BBLK, H_pad)     f32  VMEM scratch -- hidden state carried across time
    """
    tc = pl.program_id(1)  # time chunk: trailing 'arbitrary' axis -> strictly sequential

    @pl.when(tc == 0)
    def _():
        h_ref[...] = jnp.zeros_like(h_ref)

    TT = emb_ref.shape[0]
    h = h_ref[...]
    # Static unroll over the TT in-block timesteps (TT is small: 8/16), so every
    # slice below has a static offset.
    for tt in range(TT):
        h = jnp.tanh(
            emb_ref[tt]
            + jnp.dot(h, whh_ref[...], preferred_element_type=jnp.float32))
        hout_ref[:, pl.ds(tt, 1), :] = h[:, None, :]
    h_ref[...] = h


# ---------------------------------------------------------------------------
# Kernel 2: output projection.  (M, H_pad) @ (H_pad, V_pad) + b_q
# ---------------------------------------------------------------------------
def _projection_kernel(h_ref, w_ref, b_ref, o_ref):
    # K axis collapsed: one MXU call per output tile, no accumulator / no pl.when.
    o_ref[...] = (jnp.dot(h_ref[...], w_ref[...],
                          preferred_element_type=jnp.float32)
                  + b_ref[...]).astype(o_ref.dtype)


def _projection_acc_kernel(h_ref, w_ref, b_ref, o_ref, acc_ref):
    # Fallback for very large H_pad: accumulate over a K grid axis.
    k = pl.program_id(2)

    @pl.when(k == 0)
    def _():
        acc_ref[...] = jnp.zeros_like(acc_ref)

    acc_ref[...] += jnp.dot(h_ref[...], w_ref[...],
                            preferred_element_type=jnp.float32)

    @pl.when(k == pl.num_programs(2) - 1)
    def _():
        o_ref[...] = (acc_ref[...] + b_ref[...]).astype(o_ref.dtype)


# ---------------------------------------------------------------------------
# Wrapper: full RNNLMScratch.forward
# ---------------------------------------------------------------------------
def rnnlm_forward(X, params, vocab_size):
    """X: (B, T) int32 token ids -> logits (B, T, V) float32."""
    W_xh, W_hh, b_h, W_hq, b_q = params
    B, T = X.shape
    V = vocab_size
    H = W_xh.shape[1]

    # TPU-friendly padded sizes (sublane=8 for batch, lane=128 for H / V).
    B_pad = _round_up(B, 8)
    H_pad = _round_up(H, 128)
    V_pad = _round_up(V, 128)

    # Timesteps per grid iteration.  Padded steps (zero token id) come AFTER all real
    # steps, so causality means they never affect real outputs; they are sliced off.
    TT = 16 if T % 16 == 0 else 8
    T_pad = _round_up(T, TT)

    # Batch chunks: only split when >=2 TensorCores exist to shard the 'parallel' axis;
    # each chunk must stay sublane-aligned (multiple of 8).
    NB = 2 if (_num_tensorcores_per_chip() >= 2 and B_pad % 16 == 0) else 1
    BBLK = B_pad // NB

    f32 = jnp.float32
    W_xh_hp = _pad_to(W_xh.astype(f32), (W_xh.shape[0], H_pad))   # (V, H_pad) (no V pad needed)
    W_hh_p = _pad_to(W_hh.astype(f32), (H_pad, H_pad))
    b_h_p = _pad_to(b_h.astype(f32).reshape(1, H), (1, H_pad))
    W_hq_p = _pad_to(W_hq.astype(f32), (H_pad, V_pad))
    b_q_p = _pad_to(b_q.astype(f32).reshape(1, V), (1, V_pad))

    # one_hot(x) @ W_xh == W_xh[x]; fold in b_h.  Time-major (T_pad, B_pad, H_pad),
    # streamed as a pipelined input -> no W_xh residency, no in-kernel gather.
    ids_tm = jnp.zeros((T_pad, B_pad), jnp.int32).at[:T, :B].set(X.T.astype(jnp.int32))
    emb = jnp.take(W_xh_hp, ids_tm, axis=0) + b_h_p                # (T_pad, B_pad, H_pad)

    # ---- Pass 1: recurrence -> hidden states, batch-major (B_pad, T_pad, H_pad) ----
    hs = pl.pallas_call(
        _recurrence_kernel,
        out_shape=jax.ShapeDtypeStruct((B_pad, T_pad, H_pad), jnp.float32),
        grid_spec=pltpu.PrefetchScalarGridSpec(
            num_scalar_prefetch=0,
            grid=(NB, T_pad // TT),      # time MUST remain the trailing sequential axis
            in_specs=[
                pl.BlockSpec((TT, BBLK, H_pad), lambda nb, tc: (tc, nb, 0)),  # emb stream
                pl.BlockSpec((H_pad, H_pad), lambda nb, tc: (0, 0)),          # W_hh resident
            ],
            out_specs=pl.BlockSpec((BBLK, TT, H_pad), lambda nb, tc: (nb, tc, 0)),
            scratch_shapes=[pltpu.VMEM((BBLK, H_pad), jnp.float32)],          # hidden carry
        ),
        compiler_params=pltpu.CompilerParams(
            dimension_semantics=("parallel", "arbitrary")),
    )(emb, W_hh_p)

    # ---- Pass 2: hoisted output projection as one large tiled MXU matmul ----
    M = B_pad * T_pad                    # multiple of 64 -> no padding / extra copy
    hs_flat = hs.reshape(M, H_pad)       # contiguous, free reshape (batch-major layout)
    TM = _pick_tile(M, (512, 256, 128, 64, 32, 16, 8))
    TN = _pick_tile(V_pad, (512, 256, 128))

    if H_pad <= 1024:
        logits_flat = pl.pallas_call(
            _projection_kernel,
            out_shape=jax.ShapeDtypeStruct((M, V_pad), jnp.float32),
            grid_spec=pltpu.PrefetchScalarGridSpec(
                num_scalar_prefetch=0,
                grid=(M // TM, V_pad // TN),
                in_specs=[
                    pl.BlockSpec((TM, H_pad), lambda i, j: (i, 0)),
                    pl.BlockSpec((H_pad, TN), lambda i, j: (0, j)),
                    pl.BlockSpec((1, TN), lambda i, j: (0, j)),
                ],
                out_specs=pl.BlockSpec((TM, TN), lambda i, j: (i, j)),
            ),
            compiler_params=pltpu.CompilerParams(
                dimension_semantics=("parallel", "parallel")),
        )(hs_flat, W_hq_p, b_q_p)
    else:
        TK = _pick_tile(H_pad, (512, 256, 128))
        logits_flat = pl.pallas_call(
            _projection_acc_kernel,
            out_shape=jax.ShapeDtypeStruct((M, V_pad), jnp.float32),
            grid_spec=pltpu.PrefetchScalarGridSpec(
                num_scalar_prefetch=0,
                grid=(M // TM, V_pad // TN, H_pad // TK),
                in_specs=[
                    pl.BlockSpec((TM, TK), lambda i, j, k: (i, k)),
                    pl.BlockSpec((TK, TN), lambda i, j, k: (k, j)),
                    pl.BlockSpec((1, TN), lambda i, j, k: (0, j)),
                ],
                out_specs=pl.BlockSpec((TM, TN), lambda i, j, k: (i, j)),
                scratch_shapes=[pltpu.VMEM((TM, TN), jnp.float32)],
            ),
            compiler_params=pltpu.CompilerParams(
                dimension_semantics=("parallel", "parallel", "arbitrary")),
        )(hs_flat, W_hq_p, b_q_p)

    # Already batch-major: reshape is free; strip padding only.
    logits = logits_flat.reshape(B_pad, T_pad, V_pad)
    return logits[:B, :T, :V]


# ---------------------------------------------------------------------------
# Params + pure-JAX reference
# ---------------------------------------------------------------------------
def init_params(key, vocab_size, num_hiddens, sigma=0.01):
    kx, kh, kq = jax.random.split(key, 3)
    W_xh = sigma * jax.random.normal(kx, (vocab_size, num_hiddens), jnp.float32)
    W_hh = sigma * jax.random.normal(kh, (num_hiddens, num_hiddens), jnp.float32)
    b_h = jnp.zeros((num_hiddens,), jnp.float32)
    W_hq = sigma * jax.random.normal(kq, (num_hiddens, vocab_size), jnp.float32)
    b_q = jnp.zeros((vocab_size,), jnp.float32)
    return W_xh, W_hh, b_h, W_hq, b_q


def _reference_forward(X, params, vocab_size):
    """Pure-JAX reference of the same forward pass (highest matmul precision)."""
    W_xh, W_hh, b_h, W_hq, b_q = params
    embs = jax.nn.one_hot(X.T, vocab_size, dtype=jnp.float32)   # (T, B, V)
    B = X.shape[0]
    H = W_xh.shape[1]
    hi = lax.Precision.HIGHEST

    def step(h, x_t):
        h_new = jnp.tanh(jnp.dot(x_t, W_xh, precision=hi)
                         + jnp.dot(h, W_hh, precision=hi) + b_h)
        return h_new, jnp.dot(h_new, W_hq, precision=hi) + b_q

    _, outs = lax.scan(step, jnp.zeros((B, H), jnp.float32), embs)  # (T, B, V)
    return jnp.transpose(outs, (1, 0, 2))


if __name__ == "__main__":
    B, T = 8, 16          # batch, sequence length (sublane-aligned batch)
    V, Hd = 256, 128      # vocab size, num_hiddens (lane-aligned)
    sigma = 0.05

    key = jax.random.PRNGKey(0)
    kp, kx = jax.random.split(key)
    params = init_params(kp, V, Hd, sigma)
    X = jax.random.randint(kx, (B, T), 0, V, dtype=jnp.int32)

    logits = rnnlm_forward(X, params, V)
    jax.block_until_ready(logits)

    ref = _reference_forward(X, params, V)
    assert logits.shape == (B, T, V)
    max_err = float(jnp.max(jnp.abs(logits - ref)))
    # MXU default precision vs. Precision.HIGHEST reference: expected parity ~1e-5 at
    # these sizes; tolerance leaves margin for the compounded tanh recurrence.
    assert jnp.allclose(logits, ref, atol=2e-4, rtol=2e-4), f"max abs err {max_err}"

    print("KERNEL_OK")
</pallas_src>

<mosaic_0001>
module attributes {stable_mosaic.version = 11 : i64} {
  func.func @_recurrence_kernel(%arg0: i32, %arg1: i32, %arg2: memref<16x8x128xf32, #tpu.memory_space<vmem>>, %arg3: memref<128x128xf32, #tpu.memory_space<vmem>>, %arg4: memref<8x16x128xf32, #tpu.memory_space<vmem>>, %arg5: memref<8x128xf32, #tpu.memory_space<vmem>>) attributes {dimension_semantics = [#tpu.dimension_semantics<parallel>, #tpu.dimension_semantics<arbitrary>], iteration_bounds = array<i64: 1, 1>, scalar_prefetch = 0 : i64, scratch_operands = 1 : i64, tpu.core_type = #tpu.core_type<tc>, window_params = [{transform_indices = @transform_0, window_bounds = array<i64: 16, 8, 128>}, {pipeline_mode = #tpu.pipeline_mode<synchronous>, transform_indices = @transform_1, window_bounds = array<i64: 128, 128>}, {transform_indices = @transform_2, window_bounds = array<i64: 8, 16, 128>}]} {
    %c0_i32 = arith.constant 0 : i32
    %0 = arith.cmpi eq, %arg1, %c0_i32 : i32
    %1 = arith.extui %0 : i1 to i32
    %c0_i32_0 = arith.constant 0 : i32
    %2 = arith.cmpi ne, %1, %c0_i32_0 : i32
    scf.if %2 {
      %cst_132 = arith.constant 0.000000e+00 : f32
      %133 = vector.broadcast %cst_132 : f32 to vector<8x128xf32>
      %c0_133 = arith.constant 0 : index
      %c0_134 = arith.constant 0 : index
      %134 = vector.load %arg5[%c0_133, %c0_134] : memref<8x128xf32, #tpu.memory_space<vmem>>, vector<8x128xf32>
      tpu.vector_store %arg5[%c0_133, %c0_134], %133 {strides = array<i32>} : memref<8x128xf32, #tpu.memory_space<vmem>>, vector<8x128xf32>,
    } else {
    }
    %c0 = arith.constant 0 : index
    %c0_1 = arith.constant 0 : index
    %3 = vector.load %arg5[%c0, %c0_1] : memref<8x128xf32, #tpu.memory_space<vmem>>, vector<8x128xf32>
    %c0_2 = arith.constant 0 : index
    %c0_3 = arith.constant 0 : index
    %c0_4 = arith.constant 0 : index
    %4 = vector.load %arg2[%c0_2, %c0_3, %c0_4] : memref<16x8x128xf32, #tpu.memory_space<vmem>>, vector<1x8x128xf32>
    %5 = vector.shape_cast %4 : vector<1x8x128xf32> to vector<8x128xf32>
    %c0_5 = arith.constant 0 : index
    %c0_6 = arith.constant 0 : index
    %6 = vector.load %arg3[%c0_5, %c0_6] : memref<128x128xf32, #tpu.memory_space<vmem>>, vector<128x128xf32>
    %cst = arith.constant dense<0.000000e+00> : vector<8x128xf32>
    %7 = tpu.matmul %3, %6, %cst {dimension_numbers = #tpu.dot_dimension_numbers<[1], [0], [0], [1], [0, 0, 1, 1], [], []>} : vector<8x128xf32>, vector<128x128xf32>, vector<8x128xf32> -> vector<8x128xf32>
    %8 = arith.addf %5, %7 : vector<8x128xf32>
    %9 = math.tanh %8 : vector<8x128xf32>
    %10 = vector.shape_cast %9 : vector<8x128xf32> to vector<8x1x128xf32>
    %c0_7 = arith.constant 0 : index
    %c0_8 = arith.constant 0 : index
    %c0_9 = arith.constant 0 : index
    %11 = vector.load %arg4[%c0_7, %c0_8, %c0_9] : memref<8x16x128xf32, #tpu.memory_space<vmem>>, vector<8x1x128xf32>
    tpu.vector_store %arg4[%c0_7, %c0_8, %c0_9], %10 {strides = array<i32>} : memref<8x16x128xf32, #tpu.memory_space<vmem>>, vector<8x1x128xf32>,
    %c1 = arith.constant 1 : index
    %c0_10 = arith.constant 0 : index
    %c0_11 = arith.constant 0 : index
    %12 = vector.load %arg2[%c1, %c0_10, %c0_11] : memref<16x8x128xf32, #tpu.memory_space<vmem>>, vector<1x8x128xf32>
    %13 = vector.shape_cast %12 : vector<1x8x128xf32> to vector<8x128xf32>
    %c0_12 = arith.constant 0 : index
    %c0_13 = arith.constant 0 : index
    %14 = vector.load %arg3[%c0_12, %c0_13] : memref<128x128xf32, #tpu.memory_space<vmem>>, vector<128x128xf32>
    %cst_14 = arith.constant dense<0.000000e+00> : vector<8x128xf32>
    %15 = tpu.matmul %9, %14, %cst_14 {dimension_numbers = #tpu.dot_dimension_numbers<[1], [0], [0], [1], [0, 0, 1, 1], [], []>} : vector<8x128xf32>, vector<128x128xf32>, vector<8x128xf32> -> vector<8x128xf32>
    %16 = arith.addf %13, %15 : vector<8x128xf32>
    %17 = math.tanh %16 : vector<8x128xf32>
    %18 = vector.shape_cast %17 : vector<8x128xf32> to vector<8x1x128xf32>
    %c0_15 = arith.constant 0 : index
    %c1_16 = arith.constant 1 : index
    %c0_17 = arith.constant 0 : index
    %19 = vector.load %arg4[%c0_15, %c1_16, %c0_17] : memref<8x16x128xf32, #tpu.memory_space<vmem>>, vector<8x1x128xf32>
    tpu.vector_store %arg4[%c0_15, %c1_16, %c0_17], %18 {strides = array<i32>} : memref<8x16x128xf32, #tpu.memory_space<vmem>>, vector<8x1x128xf32>,
    %c2 = arith.constant 2 : index
    %c0_18 = arith.constant 0 : index
    %c0_19 = arith.constant 0 : index
    %20 = vector.load %arg2[%c2, %c0_18, %c0_19] : memref<16x8x128xf32, #tpu.memory_space<vmem>>, vector<1x8x128xf32>
    %21 = vector.shape_cast %20 : vector<1x8x128xf32> to vector<8x128xf32>
    %c0_20 = arith.constant 0 : index
    %c0_21 = arith.constant 0 : index
    %22 = vector.load %arg3[%c0_20, %c0_21] : memref<128x128xf32, #tpu.memory_space<vmem>>, vector<128x128xf32>
    %cst_22 = arith.constant dense<0.000000e+00> : vector<8x128xf32>
    %23 = tpu.matmul %17, %22, %cst_22 {dimension_numbers = #tpu.dot_dimension_numbers<[1], [0], [0], [1], [0, 0, 1, 1], [], []>} : vector<8x128xf32>, vector<128x128xf32>, vector<8x128xf32> -> vector<8x128xf32>
    %24 = arith.addf %21, %23 : vector<8x128xf32>
    %25 = math.tanh %24 : vector<8x128xf32>
    %26 = vector.shape_cast %25 : vector<8x128xf32> to vector<8x1x128xf32>
    %c0_23 = arith.constant 0 : index
    %c2_24 = arith.constant 2 : index
    %c0_25 = arith.constant 0 : index
    %27 = vector.load %arg4[%c0_23, %c2_24, %c0_25] : memref<8x16x128xf32, #tpu.memory_space<vmem>>, vector<8x1x128xf32>
    tpu.vector_store %arg4[%c0_23, %c2_24, %c0_25], %26 {strides = array<i32>} : memref<8x16x128xf32, #tpu.memory_space<vmem>>, vector<8x1x128xf32>,
    %c3 = arith.constant 3 : index
    %c0_26 = arith.constant 0 : index
    %c0_27 = arith.constant 0 : index
    %28 = vector.load %arg2[%c3, %c0_26, %c0_27] : memref<16x8x128xf32, #tpu.memory_space<vmem>>, vector<1x8x128xf32>
    %29 = vector.shape_cast %28 : vector<1x8x128xf32> to vector<8x128xf32>
    %c0_28 = arith.constant 0 : index
    %c0_29 = arith.constant 0 : index
    %30 = vector.load %arg3[%c0_28, %c0_29] : memref<128x128xf32, #tpu.memory_space<vmem>>, vector<128x128xf32>
    %cst_30 = arith.constant dense<0.000000e+00> : vector<8x128xf32>
    %31 = tpu.matmul %25, %30, %cst_30 {dimension_numbers = #tpu.dot_dimension_numbers<[1], [0], [0], [1], [0, 0, 1, 1], [], []>} : vector<8x128xf32>, vector<128x128xf32>, vector<8x128xf32> -> vector<8x128xf32>
    %32 = arith.addf %29, %31 : vector<8x128xf32>
    %33 = math.tanh %32 : vector<8x128xf32>
    %34 = vector.shape_cast %33 : vector<8x128xf32> to vector<8x1x128xf32>
    %c0_31 = arith.constant 0 : index
    %c3_32 = arith.constant 3 : index
    %c0_33 = arith.constant 0 : index
    %35 = vector.load %arg4[%c0_31, %c3_32, %c0_33] : memref<8x16x128xf32, #tpu.memory_space<vmem>>, vector<8x1x128xf32>
    tpu.vector_store %arg4[%c0_31, %c3_32, %c0_33], %34 {strides = array<i32>} : memref<8x16x128xf32, #tpu.memory_space<vmem>>, vector<8x1x128xf32>,
    %c4 = arith.constant 4 : index
    %c0_34 = arith.constant 0 : index
    %c0_35 = arith.constant 0 : index
    %36 = vector.load %arg2[%c4, %c0_34, %c0_35] : memref<16x8x128xf32, #tpu.memory_space<vmem>>, vector<1x8x128xf32>
    %37 = vector.shape_cast %36 : vector<1x8x128xf32> to vector<8x128xf32>
    %c0_36 = arith.constant 0 : index
    %c0_37 = arith.constant 0 : index
    %38 = vector.load %arg3[%c0_36, %c0_37] : memref<128x128xf32, #tpu.memory_space<vmem>>, vector<128x128xf32>
    %cst_38 = arith.constant dense<0.000000e+00> : vector<8x128xf32>
    %39 = tpu.matmul %33, %38, %cst_38 {dimension_numbers = #tpu.dot_dimension_numbers<[1], [0], [0], [1], [0, 0, 1, 1], [], []>} : vector<8x128xf32>, vector<128x128xf32>, vector<8x128xf32> -> vector<8x128xf32>
    %40 = arith.addf %37, %39 : vector<8x128xf32>
    %41 = math.tanh %40 : vector<8x128xf32>
    %42 = vector.shape_cast %41 : vector<8x128xf32> to vector<8x1x128xf32>
    %c0_39 = arith.constant 0 : index
    %c4_40 = arith.constant 4 : index
    %c0_41 = arith.constant 0 : index
    %43 = vector.load %arg4[%c0_39, %c4_40, %c0_41] : memref<8x16x128xf32, #tpu.memory_space<vmem>>, vector<8x1x128xf32>
    tpu.vector_store %arg4[%c0_39, %c4_40, %c0_41], %42 {strides = array<i32>} : memref<8x16x128xf32, #tpu.memory_space<vmem>>, vector<8x1x128xf32>,
    %c5 = arith.constant 5 : index
    %c0_42 = arith.constant 0 : index
    %c0_43 = arith.constant 0 : index
    %44 = vector.load %arg2[%c5, %c0_42, %c0_43] : memref<16x8x128xf32, #tpu.memory_space<vmem>>, vector<1x8x128xf32>
    %45 = vector.shape_cast %44 : vector<1x8x128xf32> to vector<8x128xf32>
    %c0_44 = arith.constant 0 : index
    %c0_45 = arith.constant 0 : index
    %46 = vector.load %arg3[%c0_44, %c0_45] : memref<128x128xf32, #tpu.memory_space<vmem>>, vector<128x128xf32>
    %cst_46 = arith.constant dense<0.000000e+00> : vector<8x128xf32>
    %47 = tpu.matmul %41, %46, %cst_46 {dimension_numbers = #tpu.dot_dimension_numbers<[1], [0], [0], [1], [0, 0, 1, 1], [], []>} : vector<8x128xf32>, vector<128x128xf32>, vector<8x128xf32> -> vector<8x128xf32>
    %48 = arith.addf %45, %47 : vector<8x128xf32>
    %49 = math.tanh %48 : vector<8x128xf32>
    %50 = vector.shape_cast %49 : vector<8x128xf32> to vector<8x1x128xf32>
    %c0_47 = arith.constant 0 : index
    %c5_48 = arith.constant 5 : index
    %c0_49 = arith.constant 0 : index
    %51 = vector.load %arg4[%c0_47, %c5_48, %c0_49] : memref<8x16x128xf32, #tpu.memory_space<vmem>>, vector<8x1x128xf32>
    tpu.vector_store %arg4[%c0_47, %c5_48, %c0_49], %50 {strides = array<i32>} : memref<8x16x128xf32, #tpu.memory_space<vmem>>, vector<8x1x128xf32>,
    %c6 = arith.constant 6 : index
    %c0_50 = arith.constant 0 : index
    %c0_51 = arith.constant 0 : index
    %52 = vector.load %arg2[%c6, %c0_50, %c0_51] : memref<16x8x128xf32, #tpu.memory_space<vmem>>, vector<1x8x128xf32>
    %53 = vector.shape_cast %52 : vector<1x8x128xf32> to vector<8x128xf32>
    %c0_52 = arith.constant 0 : index
    %c0_53 = arith.constant 0 : index
    %54 = vector.load %arg3[%c0_52, %c0_53] : memref<128x128xf32, #tpu.memory_space<vmem>>, vector<128x128xf32>
    %cst_54 = arith.constant dense<0.000000e+00> : vector<8x128xf32>
    %55 = tpu.matmul %49, %54, %cst_54 {dimension_numbers = #tpu.dot_dimension_numbers<[1], [0], [0], [1], [0, 0, 1, 1], [], []>} : vector<8x128xf32>, vector<128x128xf32>, vector<8x128xf32> -> vector<8x128xf32>
    %56 = arith.addf %53, %55 : vector<8x128xf32>
    %57 = math.tanh %56 : vector<8x128xf32>
    %58 = vector.shape_cast %57 : vector<8x128xf32> to vector<8x1x128xf32>
    %c0_55 = arith.constant 0 : index
    %c6_56 = arith.constant 6 : index
    %c0_57 = arith.constant 0 : index
    %59 = vector.load %arg4[%c0_55, %c6_56, %c0_57] : memref<8x16x128xf32, #tpu.memory_space<vmem>>, vector<8x1x128xf32>
    tpu.vector_store %arg4[%c0_55, %c6_56, %c0_57], %58 {strides = array<i32>} : memref<8x16x128xf32, #tpu.memory_space<vmem>>, vector<8x1x128xf32>,
    %c7 = arith.constant 7 : index
    %c0_58 = arith.constant 0 : index
    %c0_59 = arith.constant 0 : index
    %60 = vector.load %arg2[%c7, %c0_58, %c0_59] : memref<16x8x128xf32, #tpu.memory_space<vmem>>, vector<1x8x128xf32>
    %61 = vector.shape_cast %60 : vector<1x8x128xf32> to vector<8x128xf32>
    %c0_60 = arith.constant 0 : index
    %c0_61 = arith.constant 0 : index
    %62 = vector.load %arg3[%c0_60, %c0_61] : memref<128x128xf32, #tpu.memory_space<vmem>>, vector<128x128xf32>
    %cst_62 = arith.constant dense<0.000000e+00> : vector<8x128xf32>
    %63 = tpu.matmul %57, %62, %cst_62 {dimension_numbers = #tpu.dot_dimension_numbers<[1], [0], [0], [1], [0, 0, 1, 1], [], []>} : vector<8x128xf32>, vector<128x128xf32>, vector<8x128xf32> -> vector<8x128xf32>
    %64 = arith.addf %61, %63 : vector<8x128xf32>
    %65 = math.tanh %64 : vector<8x128xf32>
    %66 = vector.shape_cast %65 : vector<8x128xf32> to vector<8x1x128xf32>
    %c0_63 = arith.constant 0 : index
    %c7_64 = arith.constant 7 : index
    %c0_65 = arith.constant 0 : index
    %67 = vector.load %arg4[%c0_63, %c7_64, %c0_65] : memref<8x16x128xf32, #tpu.memory_space<vmem>>, vector<8x1x128xf32>
    tpu.vector_store %arg4[%c0_63, %c7_64, %c0_65], %66 {strides = array<i32>} : memref<8x16x128xf32, #tpu.memory_space<vmem>>, vector<8x1x128xf32>,
    %c8 = arith.constant 8 : index
    %c0_66 = arith.constant 0 : index
    %c0_67 = arith.constant 0 : index
    %68 = vector.load %arg2[%c8, %c0_66, %c0_67] : memref<16x8x128xf32, #tpu.memory_space<vmem>>, vector<1x8x128xf32>
    %69 = vector.shape_cast %68 : vector<1x8x128xf32> to vector<8x128xf32>
    %c0_68 = arith.constant 0 : index
    %c0_69 = arith.constant 0 : index
    %70 = vector.load %arg3[%c0_68, %c0_69] : memref<128x128xf32, #tpu.memory_space<vmem>>, vector<128x128xf32>
    %cst_70 = arith.constant dense<0.000000e+00> : vector<8x128xf32>
    %71 = tpu.matmul %65, %70, %cst_70 {dimension_numbers = #tpu.dot_dimension_numbers<[1], [0], [0], [1], [0, 0, 1, 1], [], []>} : vector<8x128xf32>, vector<128x128xf32>, vector<8x128xf32> -> vector<8x128xf32>
    %72 = arith.addf %69, %71 : vector<8x128xf32>
    %73 = math.tanh %72 : vector<8x128xf32>
    %74 = vector.shape_cast %73 : vector<8x128xf32> to vector<8x1x128xf32>
    %c0_71 = arith.constant 0 : index
    %c8_72 = arith.constant 8 : index
    %c0_73 = arith.constant 0 : index
    %75 = vector.load %arg4[%c0_71, %c8_72, %c0_73] : memref<8x16x128xf32, #tpu.memory_space<vmem>>, vector<8x1x128xf32>
    tpu.vector_store %arg4[%c0_71, %c8_72, %c0_73], %74 {strides = array<i32>} : memref<8x16x128xf32, #tpu.memory_space<vmem>>, vector<8x1x128xf32>,
    %c9 = arith.constant 9 : index
    %c0_74 = arith.constant 0 : index
    %c0_75 = arith.constant 0 : index
    %76 = vector.load %arg2[%c9, %c0_74, %c0_75] : memref<16x8x128xf32, #tpu.memory_space<vmem>>, vector<1x8x128xf32>
    %77 = vector.shape_cast %76 : vector<1x8x128xf32> to vector<8x128xf32>
    %c0_76 = arith.constant 0 : index
    %c0_77 = arith.constant 0 : index
    %78 = vector.load %arg3[%c0_76, %c0_77] : memref<128x128xf32, #tpu.memory_space<vmem>>, vector<128x128xf32>
    %cst_78 = arith.constant dense<0.000000e+00> : vector<8x128xf32>
    %79 = tpu.matmul %73, %78, %cst_78 {dimension_numbers = #tpu.dot_dimension_numbers<[1], [0], [0], [1], [0, 0, 1, 1], [], []>} : vector<8x128xf32>, vector<128x128xf32>, vector<8x128xf32> -> vector<8x128xf32>
    %80 = arith.addf %77, %79 : vector<8x128xf32>
    %81 = math.tanh %80 : vector<8x128xf32>
    %82 = vector.shape_cast %81 : vector<8x128xf32> to vector<8x1x128xf32>
    %c0_79 = arith.constant 0 : index
    %c9_80 = arith.constant 9 : index
    %c0_81 = arith.constant 0 : index
    %83 = vector.load %arg4[%c0_79, %c9_80, %c0_81] : memref<8x16x128xf32, #tpu.memory_space<vmem>>, vector<8x1x128xf32>
    tpu.vector_store %arg4[%c0_79, %c9_80, %c0_81], %82 {strides = array<i32>} : memref<8x16x128xf32, #tpu.memory_space<vmem>>, vector<8x1x128xf32>,
    %c10 = arith.constant 10 : index
    %c0_82 = arith.constant 0 : index
    %c0_83 = arith.constant 0 : index
    %84 = vector.load %arg2[%c10, %c0_82, %c0_83] : memref<16x8x128xf32, #tpu.memory_space<vmem>>, vector<1x8x128xf32>
    %85 = vector.shape_cast %84 : vector<1x8x128xf32> to vector<8x128xf32>
    %c0_84 = arith.constant 0 : index
    %c0_85 = arith.constant 0 : index
    %86 = vector.load %arg3[%c0_84, %c0_85] : memref<128x128xf32, #tpu.memory_space<vmem>>, vector<128x128xf32>
    %cst_86 = arith.constant dense<0.000000e+00> : vector<8x128xf32>
    %87 = tpu.matmul %81, %86, %cst_86 {dimension_numbers = #tpu.dot_dimension_numbers<[1], [0], [0], [1], [0, 0, 1, 1], [], []>} : vector<8x128xf32>, vector<128x128xf32>, vector<8x128xf32> -> vector<8x128xf32>
    %88 = arith.addf %85, %87 : vector<8x128xf32>
    %89 = math.tanh %88 : vector<8x128xf32>
    %90 = vector.shape_cast %89 : vector<8x128xf32> to vector<8x1x128xf32>
    %c0_87 = arith.constant 0 : index
    %c10_88 = arith.constant 10 : index
    %c0_89 = arith.constant 0 : index
    %91 = vector.load %arg4[%c0_87, %c10_88, %c0_89] : memref<8x16x128xf32, #tpu.memory_space<vmem>>, vector<8x1x128xf32>
    tpu.vector_store %arg4[%c0_87, %c10_88, %c0_89], %90 {strides = array<i32>} : memref<8x16x128xf32, #tpu.memory_space<vmem>>, vector<8x1x128xf32>,
    %c11 = arith.constant 11 : index
    %c0_90 = arith.constant 0 : index
    %c0_91 = arith.constant 0 : index
    %92 = vector.load %arg2[%c11, %c0_90, %c0_91] : memref<16x8x128xf32, #tpu.memory_space<vmem>>, vector<1x8x128xf32>
    %93 = vector.shape_cast %92 : vector<1x8x128xf32> to vector<8x128xf32>
    %c0_92 = arith.constant 0 : index
    %c0_93 = arith.constant 0 : index
    %94 = vector.load %arg3[%c0_92, %c0_93] : memref<128x128xf32, #tpu.memory_space<vmem>>, vector<128x128xf32>
    %cst_94 = arith.constant dense<0.000000e+00> : vector<8x128xf32>
    %95 = tpu.matmul %89, %94, %cst_94 {dimension_numbers = #tpu.dot_dimension_numbers<[1], [0], [0], [1], [0, 0, 1, 1], [], []>} : vector<8x128xf32>, vector<128x128xf32>, vector<8x128xf32> -> vector<8x128xf32>
    %96 = arith.addf %93, %95 : vector<8x128xf32>
    %97 = math.tanh %96 : vector<8x128xf32>
    %98 = vector.shape_cast %97 : vector<8x128xf32> to vector<8x1x128xf32>
    %c0_95 = arith.constant 0 : index
    %c11_96 = arith.constant 11 : index
    %c0_97 = arith.constant 0 : index
    %99 = vector.load %arg4[%c0_95, %c11_96, %c0_97] : memref<8x16x128xf32, #tpu.memory_space<vmem>>, vector<8x1x128xf32>
    tpu.vector_store %arg4[%c0_95, %c11_96, %c0_97], %98 {strides = array<i32>} : memref<8x16x128xf32, #tpu.memory_space<vmem>>, vector<8x1x128xf32>,
    %c12 = arith.constant 12 : index
    %c0_98 = arith.constant 0 : index
    %c0_99 = arith.constant 0 : index
    %100 = vector.load %arg2[%c12, %c0_98, %c0_99] : memref<16x8x128xf32, #tpu.memory_space<vmem>>, vector<1x8x128xf32>
    %101 = vector.shape_cast %100 : vector<1x8x128xf32> to vector<8x128xf32>
    %c0_100 = arith.constant 0 : index
    %c0_101 = arith.constant 0 : index
    %102 = vector.load %arg3[%c0_100, %c0_101] : memref<128x128xf32, #tpu.memory_space<vmem>>, vector<128x128xf32>
    %cst_102 = arith.constant dense<0.000000e+00> : vector<8x128xf32>
    %103 = tpu.matmul %97, %102, %cst_102 {dimension_numbers = #tpu.dot_dimension_numbers<[1], [0], [0], [1], [0, 0, 1, 1], [], []>} : vector<8x128xf32>, vector<128x128xf32>, vector<8x128xf32> -> vector<8x128xf32>
    %104 = arith.addf %101, %103 : vector<8x128xf32>
    %105 = math.tanh %104 : vector<8x128xf32>
    %106 = vector.shape_cast %105 : vector<8x128xf32> to vector<8x1x128xf32>
    %c0_103 = arith.constant 0 : index
    %c12_104 = arith.constant 12 : index
    %c0_105 = arith.constant 0 : index
    %107 = vector.load %arg4[%c0_103, %c12_104, %c0_105] : memref<8x16x128xf32, #tpu.memory_space<vmem>>, vector<8x1x128xf32>
    tpu.vector_store %arg4[%c0_103, %c12_104, %c0_105], %106 {strides = array<i32>} : memref<8x16x128xf32, #tpu.memory_space<vmem>>, vector<8x1x128xf32>,
    %c13 = arith.constant 13 : index
    %c0_106 = arith.constant 0 : index
    %c0_107 = arith.constant 0 : index
    %108 = vector.load %arg2[%c13, %c0_106, %c0_107] : memref<16x8x128xf32, #tpu.memory_space<vmem>>, vector<1x8x128xf32>
    %109 = vector.shape_cast %108 : vector<1x8x128xf32> to vector<8x128xf32>
    %c0_108 = arith.constant 0 : index
    %c0_109 = arith.constant 0 : index
    %110 = vector.load %arg3[%c0_108, %c0_109] : memref<128x128xf32, #tpu.memory_space<vmem>>, vector<128x128xf32>
    %cst_110 = arith.constant dense<0.000000e+00> : vector<8x128xf32>
    %111 = tpu.matmul %105, %110, %cst_110 {dimension_numbers = #tpu.dot_dimension_numbers<[1], [0], [0], [1], [0, 0, 1, 1], [], []>} : vector<8x128xf32>, vector<128x128xf32>, vector<8x128xf32> -> vector<8x128xf32>
    %112 = arith.addf %109, %111 : vector<8x128xf32>
    %113 = math.tanh %112 : vector<8x128xf32>
    %114 = vector.shape_cast %113 : vector<8x128xf32> to vector<8x1x128xf32>
    %c0_111 = arith.constant 0 : index
    %c13_112 = arith.constant 13 : index
    %c0_113 = arith.constant 0 : index
    %115 = vector.load %arg4[%c0_111, %c13_112, %c0_113] : memref<8x16x128xf32, #tpu.memory_space<vmem>>, vector<8x1x128xf32>
    tpu.vector_store %arg4[%c0_111, %c13_112, %c0_113], %114 {strides = array<i32>} : memref<8x16x128xf32, #tpu.memory_space<vmem>>, vector<8x1x128xf32>,
    %c14 = arith.constant 14 : index
    %c0_114 = arith.constant 0 : index
    %c0_115 = arith.constant 0 : index
    %116 = vector.load %arg2[%c14, %c0_114, %c0_115] : memref<16x8x128xf32, #tpu.memory_space<vmem>>, vector<1x8x128xf32>
    %117 = vector.shape_cast %116 : vector<1x8x128xf32> to vector<8x128xf32>
    %c0_116 = arith.constant 0 : index
    %c0_117 = arith.constant 0 : index
    %118 = vector.load %arg3[%c0_116, %c0_117] : memref<128x128xf32, #tpu.memory_space<vmem>>, vector<128x128xf32>
    %cst_118 = arith.constant dense<0.000000e+00> : vector<8x128xf32>
    %119 = tpu.matmul %113, %118, %cst_118 {dimension_numbers = #tpu.dot_dimension_numbers<[1], [0], [0], [1], [0, 0, 1, 1], [], []>} : vector<8x128xf32>, vector<128x128xf32>, vector<8x128xf32> -> vector<8x128xf32>
    %120 = arith.addf %117, %119 : vector<8x128xf32>
    %121 = math.tanh %120 : vector<8x128xf32>
    %122 = vector.shape_cast %121 : vector<8x128xf32> to vector<8x1x128xf32>
    %c0_119 = arith.constant 0 : index
    %c14_120 = arith.constant 14 : index
    %c0_121 = arith.constant 0 : index
    %123 = vector.load %arg4[%c0_119, %c14_120, %c0_121] : memref<8x16x128xf32, #tpu.memory_space<vmem>>, vector<8x1x128xf32>
    tpu.vector_store %arg4[%c0_119, %c14_120, %c0_121], %122 {strides = array<i32>} : memref<8x16x128xf32, #tpu.memory_space<vmem>>, vector<8x1x128xf32>,
    %c15 = arith.constant 15 : index
    %c0_122 = arith.constant 0 : index
    %c0_123 = arith.constant 0 : index
    %124 = vector.load %arg2[%c15, %c0_122, %c0_123] : memref<16x8x128xf32, #tpu.memory_space<vmem>>, vector<1x8x128xf32>
    %125 = vector.shape_cast %124 : vector<1x8x128xf32> to vector<8x128xf32>
    %c0_124 = arith.constant 0 : index
    %c0_125 = arith.constant 0 : index
    %126 = vector.load %arg3[%c0_124, %c0_125] : memref<128x128xf32, #tpu.memory_space<vmem>>, vector<128x128xf32>
    %cst_126 = arith.constant dense<0.000000e+00> : vector<8x128xf32>
    %127 = tpu.matmul %121, %126, %cst_126 {dimension_numbers = #tpu.dot_dimension_numbers<[1], [0], [0], [1], [0, 0, 1, 1], [], []>} : vector<8x128xf32>, vector<128x128xf32>, vector<8x128xf32> -> vector<8x128xf32>
    %128 = arith.addf %125, %127 : vector<8x128xf32>
    %129 = math.tanh %128 : vector<8x128xf32>
    %130 = vector.shape_cast %129 : vector<8x128xf32> to vector<8x1x128xf32>
    %c0_127 = arith.constant 0 : index
    %c15_128 = arith.constant 15 : index
    %c0_129 = arith.constant 0 : index
    %131 = vector.load %arg4[%c0_127, %c15_128, %c0_129] : memref<8x16x128xf32, #tpu.memory_space<vmem>>, vector<8x1x128xf32>
    tpu.vector_store %arg4[%c0_127, %c15_128, %c0_129], %130 {strides = array<i32>} : memref<8x16x128xf32, #tpu.memory_space<vmem>>, vector<8x1x128xf32>,
    %c0_130 = arith.constant 0 : index
    %c0_131 = arith.constant 0 : index
    %132 = vector.load %arg5[%c0_130, %c0_131] : memref<8x128xf32, #tpu.memory_space<vmem>>, vector<8x128xf32>
    tpu.vector_store %arg5[%c0_130, %c0_131], %129 {strides = array<i32>} : memref<8x128xf32, #tpu.memory_space<vmem>>, vector<8x128xf32>,
    return
  }
  func.func @transform_0(%arg0: i32, %arg1: i32) -> (i32, i32, i32) {
    %c0_i32 = arith.constant 0 : i32
    %c0_i32_0 = arith.constant 0 : i32
    return %arg1, %arg0, %c0_i32 : i32, i32, i32
  }
  func.func @transform_1(%arg0: i32, %arg1: i32) -> (i32, i32) {
    %c0_i32 = arith.constant 0 : i32
    %c0_i32_0 = arith.constant 0 : i32
    %c0_i32_1 = arith.constant 0 : i32
    return %c0_i32, %c0_i32_0 : i32, i32
  }
  func.func @transform_2(%arg0: i32, %arg1: i32) -> (i32, i32, i32) {
    %c0_i32 = arith.constant 0 : i32
    %c0_i32_0 = arith.constant 0 : i32
    return %arg0, %arg1, %c0_i32 : i32, i32, i32
  }
}

</mosaic_0001>

<llo_original>
// kernel: tpu_custom_call.1
$region0: #{tpu_custom_call.1}
  #allocation0 [shape = 'u32[]', space=smem, size = 0x4, offset = 0x4, fixed_abs, tag = 'smem constant byte address 0x4 - core index']
  #allocation1 [shape = 'u32[72,128]{1,0:T(1,128)}', space=vmem, size = 0x9000, scoped, tag = 'internal scratch']
  #allocation2 [shape = 'f32[8,128]{1,0:T(8,128)}', space=vmem, size = 0x1000, scoped, tag = 'scratch operand']
  %s0 = inlined_call_operand.hbm [shape: f32[16,8,128], index: 0, kind: input, shape index: {}]
  %s1 = inlined_call_operand.hbm [shape: f32[128,128], index: 1, kind: input, shape index: {}]
  %s2 = inlined_call_operand.hbm [shape: f32[8,16,128], index: 2, kind: output, shape index: {}]
  %s3 = sld [smem:[#allocation0]]
  $region30: #{tpu_custom_call.1} parent=0
    _
  %s5 = ssub.s32 1, %s3
  %s6 = scalar_select 0, %s5, %s3
  $region1: #{tpu_custom_call.1} parent=0
    #allocation3 [shape = 'u8[65536]{0}', space=vmem, size = 0x10000, scoped, tag = 'input window, operand 0, single buffered']
    #allocation4 [shape = 's32[1]{0}', space=sflag, size = 0x4, scoped, tag = 'scoped memory for tpu_custom_call.1']
    #allocation5 [shape = 's32[1]{0}', space=sflag, size = 0x4, scoped, tag = 'scoped memory for tpu_custom_call.1']
    #allocation6 [shape = 'u8[65536]{0}', space=vmem, size = 0x10000, scoped, tag = 'input window, operand 1, single buffered']
    #allocation7 [shape = 's32[1]{0}', space=sflag, size = 0x4, scoped, tag = 'scoped memory for tpu_custom_call.1']
    #allocation8 [shape = 'u8[65536]{0}', space=vmem, size = 0x10000, scoped, tag = 'output window, operand 0, single buffered']
    %7 = vsyncpa [#allocation4], 0
    %8 = vsyncpa [#allocation7], 0
    %9 = vsyncpa [#allocation5], 0
    // Predicated region
    $region2: #{tpu_custom_call.1} parent=1 // pred_check
      _
    $region3: #{tpu_custom_call.1} parent=1 // pred_check_branch
      %11 = sbr.rel (0) target = $region5
    $region4: #{tpu_custom_call.1} parent=1 // pred_region
      %13 = vsyncadd [#allocation4], 0
      %s14 = sshll.u32 %s0, 4
      %s15 = int_to_ptr.hbm [resolvable:$true] %s14
      %s16 = sshll.u32 [#allocation3], 4
      %s17 = int_to_ptr.vmem [resolvable:$true] %s16
      %22 = dma.hbm_to_vmem [thread:$0]  %s15, 2048, %s17, [#allocation4], 128, 128, 8
    $region5: #{tpu_custom_call.1} parent=1 // pred_fallthru
      _
    // Predicated region
    $region6: #{tpu_custom_call.1} parent=1 // pred_check
      _
    $region7: #{tpu_custom_call.1} parent=1 // pred_check_branch
      %24 = sbr.rel (0) target = $region9
    $region8: #{tpu_custom_call.1} parent=1 // pred_region
      %26 = vsyncadd [#allocation7], 0
      %s27 = sshll.u32 %s1, 4
      %s28 = int_to_ptr.hbm [resolvable:$true] %s27
      %s29 = sshll.u32 [#allocation6], 4
      %s30 = int_to_ptr.vmem [resolvable:$true] %s29
      %35 = dma.hbm_to_vmem [thread:$0]  %s28, 2048, %s30, [#allocation7], 128, 128, 8
    $region9: #{tpu_custom_call.1} parent=1 // pred_fallthru
      _
    // Predicated region
    $region10: #{tpu_custom_call.1} parent=1 // pred_check
      _
    $region11: #{tpu_custom_call.1} parent=1 // pred_check_branch
      %37 = sbr.rel (0) target = $region13
    $region12: #{tpu_custom_call.1} parent=1 // pred_region
      %39 = dma.done [#allocation4], 2048
    $region13: #{tpu_custom_call.1} parent=1 // pred_fallthru
      _
    // Predicated region
    $region14: #{tpu_custom_call.1} parent=1 // pred_check
      _
    $region15: #{tpu_custom_call.1} parent=1 // pred_check_branch
      %41 = sbr.rel (0) target = $region17
    $region16: #{tpu_custom_call.1} parent=1 // pred_region
      %43 = dma.done [#allocation7], 2048
    $region17: #{tpu_custom_call.1} parent=1 // pred_fallthru
      _
    %p44 = scmp.eq.s32.totalorder 0, 0
    // Predicated region
    $region18: #{tpu_custom_call.1} parent=1 // pred_check
      %p45 = pneg %p44
    $region19: #{tpu_custom_call.1} parent=1 // pred_check_branch
      %47 = sbr.rel (%p45) target = $region21
    $region20: #{tpu_custom_call.1} parent=1 // pred_region
      %48 = vst [vmem:[#allocation2] sm:$0xff] 0.0
    $region21: #{tpu_custom_call.1} parent=1 // pred_fallthru
      _
    %v49 = vld [vmem:[#allocation2] sm:$0xff]
    %v50 = vld [vmem:[#allocation3] sm:$0xff]
    %v51 = vld [vmem:[#allocation6] sm:$0xff]
    %v52 = vld [vmem:[#allocation6 + $0x8] sm:$0xff]
    %v53 = vld [vmem:[#allocation6 + $0x10] sm:$0xff]
    %v54 = vld [vmem:[#allocation6 + $0x18] sm:$0xff]
    %v55 = vld [vmem:[#allocation6 + $0x20] sm:$0xff]
    %v56 = vld [vmem:[#allocation6 + $0x28] sm:$0xff]
    %v57 = vld [vmem:[#allocation6 + $0x30] sm:$0xff]
    %v58 = vld [vmem:[#allocation6 + $0x38] sm:$0xff]
    %v59 = vld [vmem:[#allocation6 + $0x40] sm:$0xff]
    %v60 = vld [vmem:[#allocation6 + $0x48] sm:$0xff]
    %v61 = vld [vmem:[#allocation6 + $0x50] sm:$0xff]
    %v62 = vld [vmem:[#allocation6 + $0x58] sm:$0xff]
    %v63 = vld [vmem:[#allocation6 + $0x60] sm:$0xff]
    %v64 = vld [vmem:[#allocation6 + $0x68] sm:$0xff]
    %v65 = vld [vmem:[#allocation6 + $0x70] sm:$0xff]
    %v66 = vld [vmem:[#allocation6 + $0x78] sm:$0xff]
    %67 = vmatpush.msra.mxu0 %v66
    %68 = vmatpush.msra.mxu0 %v65
    %69 = vmatpush.msra.mxu0 %v64
    %70 = vmatpush.msra.mxu0 %v63
    %71 = vmatpush.msra.mxu0 %v62
    %72 = vmatpush.msra.mxu0 %v61
    %73 = vmatpush.msra.mxu0 %v60
    %74 = vmatpush.msra.mxu0 %v59
    %75 = vmatpush.msra.mxu0 %v58
    %76 = vmatpush.msra.mxu0 %v57
    %77 = vmatpush.msra.mxu0 %v56
    %78 = vmatpush.msra.mxu0 %v55
    %79 = vmatpush.msra.mxu0 %v54
    %80 = vmatpush.msra.mxu0 %v53
    %81 = vmatpush.msra.mxu0 %v52
    %82 = vmatpush.msra.mxu0 %v51
    %83 = vmatmul.f32.gmra.mxu0 %v49
    %v84 = vpop.f32.mrf.mxu0
    %v85 = vadd.f32 0.0, %v84
    %86 = vdwg.mxu0
    %v87 = vadd.f32 %v50, %v85
    %v88 = vtanh.pop %v87
    %v90 = vrot.slane %v88, 1
    %v91 = vrot.slane %v88, 2
    %v92 = vrot.slane %v88, 3
    %v93 = vrot.slane %v88, 4
    %v94 = vrot.slane %v88, 5
    %v95 = vrot.slane %v88, 6
    %v96 = vrot.slane %v88, 7
    %104 = vst [vmem:[#allocation8] sm:$0x1] %v88
    %105 = vst [vmem:[#allocation8 + $0x10] sm:$0x1] %v90
    %106 = vst [vmem:[#allocation8 + $0x20] sm:$0x1] %v91
    %107 = vst [vmem:[#allocation8 + $0x30] sm:$0x1] %v92
    %108 = vst [vmem:[#allocation8 + $0x40] sm:$0x1] %v93
    %109 = vst [vmem:[#allocation8 + $0x50] sm:$0x1] %v94
    %110 = vst [vmem:[#allocation8 + $0x60] sm:$0x1] %v95
    %111 = vst [vmem:[#allocation8 + $0x70] sm:$0x1] %v96
    %s112 = scalar_lea.vmem [#allocation3], 8
    %v113 = vld [vmem:[%s112] sm:$0xff]
    %v114 = vld [vmem:[#allocation6] sm:$0xff]
    %v115 = vld [vmem:[#allocation6 + $0x8] sm:$0xff]
    %v116 = vld [vmem:[#allocation6 + $0x10] sm:$0xff]
    %v117 = vld [vmem:[#allocation6 + $0x18] sm:$0xff]
    %v118 = vld [vmem:[#allocation6 + $0x20] sm:$0xff]
    %v119 = vld [vmem:[#allocation6 + $0x28] sm:$0xff]
    %v120 = vld [vmem:[#allocation6 + $0x30] sm:$0xff]
    %v121 = vld [vmem:[#allocation6 + $0x38] sm:$0xff]
    %v122 = vld [vmem:[#allocation6 + $0x40] sm:$0xff]
    %v123 = vld [vmem:[#allocation6 + $0x48] sm:$0xff]
    %v124 = vld [vmem:[#allocation6 + $0x50] sm:$0xff]
    %v125 = vld [vmem:[#allocation6 + $0x58] sm:$0xff]
    %v126 = vld [vmem:[#allocation6 + $0x60] sm:$0xff]
    %v127 = vld [vmem:[#allocation6 + $0x68] sm:$0xff]
    %v128 = vld [vmem:[#allocation6 + $0x70] sm:$0xff]
    %v129 = vld [vmem:[#allocation6 + $0x78] sm:$0xff]
    %130 = vmatpush.msra.mxu0 %v129
    %131 = vmatpush.msra.mxu0 %v128
    %132 = vmatpush.msra.mxu0 %v127
    %133 = vmatpush.msra.mxu0 %v126
    %134 = vmatpush.msra.mxu0 %v125
    %135 = vmatpush.msra.mxu0 %v124
    %136 = vmatpush.msra.mxu0 %v123
    %137 = vmatpush.msra.mxu0 %v122
    %138 = vmatpush.msra.mxu0 %v121
    %139 = vmatpush.msra.mxu0 %v120
    %140 = vmatpush.msra.mxu0 %v119
    %141 = vmatpush.msra.mxu0 %v118
    %142 = vmatpush.msra.mxu0 %v117
    %143 = vmatpush.msra.mxu0 %v116
    %144 = vmatpush.msra.mxu0 %v115
    %145 = vmatpush.msra.mxu0 %v114
    %146 = vmatmul.f32.gmra.mxu0 %v88
    %v147 = vpop.f32.mrf.mxu0
    %v148 = vadd.f32 0.0, %v147
    %149 = vdwg.mxu0
    %v150 = vadd.f32 %v113, %v148
    %v151 = vtanh.pop %v150
    %v153 = vrot.slane %v151, 1
    %v154 = vrot.slane %v151, 2
    %v155 = vrot.slane %v151, 3
    %v156 = vrot.slane %v151, 4
    %v157 = vrot.slane %v151, 5
    %v158 = vrot.slane %v151, 6
    %v159 = vrot.slane %v151, 7
    %167 = vst [vmem:[#allocation8 + $0x1] sm:$0x1] %v151
    %168 = vst [vmem:[#allocation8 + $0x11] sm:$0x1] %v153
    %169 = vst [vmem:[#allocation8 + $0x21] sm:$0x1] %v154
    %170 = vst [vmem:[#allocation8 + $0x31] sm:$0x1] %v155
    %171 = vst [vmem:[#allocation8 + $0x41] sm:$0x1] %v156
    %172 = vst [vmem:[#allocation8 + $0x51] sm:$0x1] %v157
    %173 = vst [vmem:[#allocation8 + $0x61] sm:$0x1] %v158
    %174 = vst [vmem:[#allocation8 + $0x71] sm:$0x1] %v159
    %s175 = scalar_lea.vmem [#allocation3], 16
    %v176 = vld [vmem:[%s175] sm:$0xff]
    %v177 = vld [vmem:[#allocation6] sm:$0xff]
    %v178 = vld [vmem:[#allocation6 + $0x8] sm:$0xff]
    %v179 = vld [vmem:[#allocation6 + $0x10] sm:$0xff]
    %v180 = vld [vmem:[#allocation6 + $0x18] sm:$0xff]
    %v181 = vld [vmem:[#allocation6 + $0x20] sm:$0xff]
    %v182 = vld [vmem:[#allocation6 + $0x28] sm:$0xff]
    %v183 = vld [vmem:[#allocation6 + $0x30] sm:$0xff]
    %v184 = vld [vmem:[#allocation6 + $0x38] sm:$0xff]
    %v185 = vld [vmem:[#allocation6 + $0x40] sm:$0xff]
    %v186 = vld [vmem:[#allocation6 + $0x48] sm:$0xff]
    %v187 = vld [vmem:[#allocation6 + $0x50] sm:$0xff]
    %v188 = vld [vmem:[#allocation6 + $0x58] sm:$0xff]
    %v189 = vld [vmem:[#allocation6 + $0x60] sm:$0xff]
    %v190 = vld [vmem:[#allocation6 + $0x68] sm:$0xff]
    %v191 = vld [vmem:[#allocation6 + $0x70] sm:$0xff]
    %v192 = vld [vmem:[#allocation6 + $0x78] sm:$0xff]
    %193 = vmatpush.msra.mxu0 %v192
    %194 = vmatpush.msra.mxu0 %v191
    %195 = vmatpush.msra.mxu0 %v190
    %196 = vmatpush.msra.mxu0 %v189
    %197 = vmatpush.msra.mxu0 %v188
    %198 = vmatpush.msra.mxu0 %v187
    %199 = vmatpush.msra.mxu0 %v186
    %200 = vmatpush.msra.mxu0 %v185
    %201 = vmatpush.msra.mxu0 %v184
    %202 = vmatpush.msra.mxu0 %v183
    %203 = vmatpush.msra.mxu0 %v182
    %204 = vmatpush.msra.mxu0 %v181
    %205 = vmatpush.msra.mxu0 %v180
    %206 = vmatpush.msra.mxu0 %v179
    %207 = vmatpush.msra.mxu0 %v178
    %208 = vmatpush.msra.mxu0 %v177
    %209 = vmatmul.f32.gmra.mxu0 %v151
    %v210 = vpop.f32.mrf.mxu0
    %v211 = vadd.f32 0.0, %v210
    %212 = vdwg.mxu0
    %v213 = vadd.f32 %v176, %v211
    %v214 = vtanh.pop %v213
    %v216 = vrot.slane %v214, 1
    %v217 = vrot.slane %v214, 2
    %v218 = vrot.slane %v214, 3
    %v219 = vrot.slane %v214, 4
    %v220 = vrot.slane %v214, 5
    %v221 = vrot.slane %v214, 6
    %v222 = vrot.slane %v214, 7
    %230 = vst [vmem:[#allocation8 + $0x2] sm:$0x1] %v214
    %231 = vst [vmem:[#allocation8 + $0x12] sm:$0x1] %v216
    %232 = vst [vmem:[#allocation8 + $0x22] sm:$0x1] %v217
    %233 = vst [vmem:[#allocation8 + $0x32] sm:$0x1] %v218
    %234 = vst [vmem:[#allocation8 + $0x42] sm:$0x1] %v219
    %235 = vst [vmem:[#allocation8 + $0x52] sm:$0x1] %v220
    %236 = vst [vmem:[#allocation8 + $0x62] sm:$0x1] %v221
    %237 = vst [vmem:[#allocation8 + $0x72] sm:$0x1] %v222
    %s238 = scalar_lea.vmem [#allocation3], 24
    %v239 = vld [vmem:[%s238] sm:$0xff]
    %v240 = vld [vmem:[#allocation6] sm:$0xff]
    %v241 = vld [vmem:[#allocation6 + $0x8] sm:$0xff]
    %v242 = vld [vmem:[#allocation6 + $0x10] sm:$0xff]
    %v243 = vld [vmem:[#allocation6 + $0x18] sm:$0xff]
    %v244 = vld [vmem:[#allocation6 + $0x20] sm:$0xff]
    %v245 = vld [vmem:[#allocation6 + $0x28] sm:$0xff]
    %v246 = vld [vmem:[#allocation6 + $0x30] sm:$0xff]
    %v247 = vld [vmem:[#allocation6 + $0x38] sm:$0xff]
    %v248 = vld [vmem:[#allocation6 + $0x40] sm:$0xff]
    %v249 = vld [vmem:[#allocation6 + $0x48] sm:$0xff]
    %v250 = vld [vmem:[#allocation6 + $0x50] sm:$0xff]
    %v251 = vld [vmem:[#allocation6 + $0x58] sm:$0xff]
    %v252 = vld [vmem:[#allocation6 + $0x60] sm:$0xff]
    %v253 = vld [vmem:[#allocation6 + $0x68] sm:$0xff]
    %v254 = vld [vmem:[#allocation6 + $0x70] sm:$0xff]
    %v255 = vld [vmem:[#allocation6 + $0x78] sm:$0xff]
    %256 = vmatpush.msra.mxu0 %v255
    %257 = vmatpush.msra.mxu0 %v254
    %258 = vmatpush.msra.mxu0 %v253
    %259 = vmatpush.msra.mxu0 %v252
    %260 = vmatpush.msra.mxu0 %v251
    %261 = vmatpush.msra.mxu0 %v250
    %262 = vmatpush.msra.mxu0 %v249
    %263 = vmatpush.msra.mxu0 %v248
    %264 = vmatpush.msra.mxu0 %v247
    %265 = vmatpush.msra.mxu0 %v246
    %266 = vmatpush.msra.mxu0 %v245
    %267 = vmatpush.msra.mxu0 %v244
    %268 = vmatpush.msra.mxu0 %v243
    %269 = vmatpush.msra.mxu0 %v242
    %270 = vmatpush.msra.mxu0 %v241
    %271 = vmatpush.msra.mxu0 %v240
    %272 = vmatmul.f32.gmra.mxu0 %v214
    %v273 = vpop.f32.mrf.mxu0
    %v274 = vadd.f32 0.0, %v273
    %275 = vdwg.mxu0
    %v276 = vadd.f32 %v239, %v274
    %v277 = vtanh.pop %v276
    %v279 = vrot.slane %v277, 1
    %v280 = vrot.slane %v277, 2
    %v281 = vrot.slane %v277, 3
    %v282 = vrot.slane %v277, 4
    %v283 = vrot.slane %v277, 5
    %v284 = vrot.slane %v277, 6
    %v285 = vrot.slane %v277, 7
    %293 = vst [vmem:[#allocation8 + $0x3] sm:$0x1] %v277
    %294 = vst [vmem:[#allocation8 + $0x13] sm:$0x1] %v279
    %295 = vst [vmem:[#allocation8 + $0x23] sm:$0x1] %v280
    %296 = vst [vmem:[#allocation8 + $0x33] sm:$0x1] %v281
    %297 = vst [vmem:[#allocation8 + $0x43] sm:$0x1] %v282
    %298 = vst [vmem:[#allocation8 + $0x53] sm:$0x1] %v283
    %299 = vst [vmem:[#allocation8 + $0x63] sm:$0x1] %v284
    %300 = vst [vmem:[#allocation8 + $0x73] sm:$0x1] %v285
    %s301 = scalar_lea.vmem [#allocation3], 32
    %v302 = vld [vmem:[%s301] sm:$0xff]
    %v303 = vld [vmem:[#allocation6] sm:$0xff]
    %v304 = vld [vmem:[#allocation6 + $0x8] sm:$0xff]
    %v305 = vld [vmem:[#allocation6 + $0x10] sm:$0xff]
    %v306 = vld [vmem:[#allocation6 + $0x18] sm:$0xff]
    %v307 = vld [vmem:[#allocation6 + $0x20] sm:$0xff]
    %v308 = vld [vmem:[#allocation6 + $0x28] sm:$0xff]
    %v309 = vld [vmem:[#allocation6 + $0x30] sm:$0xff]
    %v310 = vld [vmem:[#allocation6 + $0x38] sm:$0xff]
    %v311 = vld [vmem:[#allocation6 + $0x40] sm:$0xff]
    %v312 = vld [vmem:[#allocation6 + $0x48] sm:$0xff]
    %v313 = vld [vmem:[#allocation6 + $0x50] sm:$0xff]
    %v314 = vld [vmem:[#allocation6 + $0x58] sm:$0xff]
    %v315 = vld [vmem:[#allocation6 + $0x60] sm:$0xff]
    %v316 = vld [vmem:[#allocation6 + $0x68] sm:$0xff]
    %v317 = vld [vmem:[#allocation6 + $0x70] sm:$0xff]
    %v318 = vld [vmem:[#allocation6 + $0x78] sm:$0xff]
    %319 = vmatpush.msra.mxu0 %v318
    %320 = vmatpush.msra.mxu0 %v317
    %321 = vmatpush.msra.mxu0 %v316
    %322 = vmatpush.msra.mxu0 %v315
    %323 = vmatpush.msra.mxu0 %v314
    %324 = vmatpush.msra.mxu0 %v313
    %325 = vmatpush.msra.mxu0 %v312
    %326 = vmatpush.msra.mxu0 %v311
    %327 = vmatpush.msra.mxu0 %v310
    %328 = vmatpush.msra.mxu0 %v309
    %329 = vmatpush.msra.mxu0 %v308
    %330 = vmatpush.msra.mxu0 %v307
    %331 = vmatpush.msra.mxu0 %v306
    %332 = vmatpush.msra.mxu0 %v305
    %333 = vmatpush.msra.mxu0 %v304
    %334 = vmatpush.msra.mxu0 %v303
    %335 = vmatmul.f32.gmra.mxu0 %v277
    %v336 = vpop.f32.mrf.mxu0
    %v337 = vadd.f32 0.0, %v336
    %338 = vdwg.mxu0
    %v339 = vadd.f32 %v302, %v337
    %v340 = vtanh.pop %v339
    %v342 = vrot.slane %v340, 1
    %v343 = vrot.slane %v340, 2
    %v344 = vrot.slane %v340, 3
    %v345 = vrot.slane %v340, 4
    %v346 = vrot.slane %v340, 5
    %v347 = vrot.slane %v340, 6
    %v348 = vrot.slane %v340, 7
    %356 = vst [vmem:[#allocation8 + $0x4] sm:$0x1] %v340
    %357 = vst [vmem:[#allocation8 + $0x14] sm:$0x1] %v342
    %358 = vst [vmem:[#allocation8 + $0x24] sm:$0x1] %v343
    %359 = vst [vmem:[#allocation8 + $0x34] sm:$0x1] %v344
    %360 = vst [vmem:[#allocation8 + $0x44] sm:$0x1] %v345
    %361 = vst [vmem:[#allocation8 + $0x54] sm:$0x1] %v346
    %362 = vst [vmem:[#allocation8 + $0x64] sm:$0x1] %v347
    %363 = vst [vmem:[#allocation8 + $0x74] sm:$0x1] %v348
    %s364 = scalar_lea.vmem [#allocation3], 40
    %v365 = vld [vmem:[%s364] sm:$0xff]
    %v366 = vld [vmem:[#allocation6] sm:$0xff]
    %v367 = vld [vmem:[#allocation6 + $0x8] sm:$0xff]
    %v368 = vld [vmem:[#allocation6 + $0x10] sm:$0xff]
    %v369 = vld [vmem:[#allocation6 + $0x18] sm:$0xff]
    %v370 = vld [vmem:[#allocation6 + $0x20] sm:$0xff]
    %v371 = vld [vmem:[#allocation6 + $0x28] sm:$0xff]
    %v372 = vld [vmem:[#allocation6 + $0x30] sm:$0xff]
    %v373 = vld [vmem:[#allocation6 + $0x38] sm:$0xff]
    %v374 = vld [vmem:[#allocation6 + $0x40] sm:$0xff]
    %v375 = vld [vmem:[#allocation6 + $0x48] sm:$0xff]
    %v376 = vld [vmem:[#allocation6 + $0x50] sm:$0xff]
    %v377 = vld [vmem:[#allocation6 + $0x58] sm:$0xff]
    %v378 = vld [vmem:[#allocation6 + $0x60] sm:$0xff]
    %v379 = vld [vmem:[#allocation6 + $0x68] sm:$0xff]
    %v380 = vld [vmem:[#allocation6 + $0x70] sm:$0xff]
    %v381 = vld [vmem:[#allocation6 + $0x78] sm:$0xff]
    %382 = vmatpush.msra.mxu0 %v381
    %383 = vmatpush.msra.mxu0 %v380
    %384 = vmatpush.msra.mxu0 %v379
    %385 = vmatpush.msra.mxu0 %v378
    %386 = vmatpush.msra.mxu0 %v377
    %387 = vmatpush.msra.mxu0 %v376
    %388 = vmatpush.msra.mxu0 %v375
    %389 = vmatpush.msra.mxu0 %v374
    %390 = vmatpush.msra.mxu0 %v373
    %391 = vmatpush.msra.mxu0 %v372
    %392 = vmatpush.msra.mxu0 %v371
    %393 = vmatpush.msra.mxu0 %v370
    %394 = vmatpush.msra.mxu0 %v369
    %395 = vmatpush.msra.mxu0 %v368
    %396 = vmatpush.msra.mxu0 %v367
    %397 = vmatpush.msra.mxu0 %v366
    %398 = vmatmul.f32.gmra.mxu0 %v340
    %v399 = vpop.f32.mrf.mxu0
    %v400 = vadd.f32 0.0, %v399
    %401 = vdwg.mxu0
    %v402 = vadd.f32 %v365, %v400
    %v403 = vtanh.pop %v402
    %v405 = vrot.slane %v403, 1
    %v406 = vrot.slane %v403, 2
    %v407 = vrot.slane %v403, 3
    %v408 = vrot.slane %v403, 4
    %v409 = vrot.slane %v403, 5
    %v410 = vrot.slane %v403, 6
    %v411 = vrot.slane %v403, 7
    %419 = vst [vmem:[#allocation8 + $0x5] sm:$0x1] %v403
    %420 = vst [vmem:[#allocation8 + $0x15] sm:$0x1] %v405
    %421 = vst [vmem:[#allocation8 + $0x25] sm:$0x1] %v406
    %422 = vst [vmem:[#allocation8 + $0x35] sm:$0x1] %v407
    %423 = vst [vmem:[#allocation8 + $0x45] sm:$0x1] %v408
    %424 = vst [vmem:[#allocation8 + $0x55] sm:$0x1] %v409
    %425 = vst [vmem:[#allocation8 + $0x65] sm:$0x1] %v410
    %426 = vst [vmem:[#allocation8 + $0x75] sm:$0x1] %v411
    %s427 = scalar_lea.vmem [#allocation3], 48
    %v428 = vld [vmem:[%s427] sm:$0xff]
    %v429 = vld [vmem:[#allocation6] sm:$0xff]
    %v430 = vld [vmem:[#allocation6 + $0x8] sm:$0xff]
    %v431 = vld [vmem:[#allocation6 + $0x10] sm:$0xff]
    %v432 = vld [vmem:[#allocation6 + $0x18] sm:$0xff]
    %v433 = vld [vmem:[#allocation6 + $0x20] sm:$0xff]
    %v434 = vld [vmem:[#allocation6 + $0x28] sm:$0xff]
    %v435 = vld [vmem:[#allocation6 + $0x30] sm:$0xff]
    %v436 = vld [vmem:[#allocation6 + $0x38] sm:$0xff]
    %v437 = vld [vmem:[#allocation6 + $0x40] sm:$0xff]
    %v438 = vld [vmem:[#allocation6 + $0x48] sm:$0xff]
    %v439 = vld [vmem:[#allocation6 + $0x50] sm:$0xff]
    %v440 = vld [vmem:[#allocation6 + $0x58] sm:$0xff]
    %v441 = vld [vmem:[#allocation6 + $0x60] sm:$0xff]
    %v442 = vld [vmem:[#allocation6 + $0x68] sm:$0xff]
    %v443 = vld [vmem:[#allocation6 + $0x70] sm:$0xff]
    %v444 = vld [vmem:[#allocation6 + $0x78] sm:$0xff]
    %445 = vmatpush.msra.mxu0 %v444
    %446 = vmatpush.msra.mxu0 %v443
    %447 = vmatpush.msra.mxu0 %v442
    %448 = vmatpush.msra.mxu0 %v441
    %449 = vmatpush.msra.mxu0 %v440
    %450 = vmatpush.msra.mxu0 %v439
    %451 = vmatpush.msra.mxu0 %v438
    %452 = vmatpush.msra.mxu0 %v437
    %453 = vmatpush.msra.mxu0 %v436
    %454 = vmatpush.msra.mxu0 %v435
    %455 = vmatpush.msra.mxu0 %v434
    %456 = vmatpush.msra.mxu0 %v433
    %457 = vmatpush.msra.mxu0 %v432
    %458 = vmatpush.msra.mxu0 %v431
    %459 = vmatpush.msra.mxu0 %v430
    %460 = vmatpush.msra.mxu0 %v429
    %461 = vmatmul.f32.gmra.mxu0 %v403
    %v462 = vpop.f32.mrf.mxu0
    %v463 = vadd.f32 0.0, %v462
    %464 = vdwg.mxu0
    %v465 = vadd.f32 %v428, %v463
    %v466 = vtanh.pop %v465
    %v468 = vrot.slane %v466, 1
    %v469 = vrot.slane %v466, 2
    %v470 = vrot.slane %v466, 3
    %v471 = vrot.slane %v466, 4
    %v472 = vrot.slane %v466, 5
    %v473 = vrot.slane %v466, 6
    %v474 = vrot.slane %v466, 7
    %482 = vst [vmem:[#allocation8 + $0x6] sm:$0x1] %v466
    %483 = vst [vmem:[#allocation8 + $0x16] sm:$0x1] %v468
    %484 = vst [vmem:[#allocation8 + $0x26] sm:$0x1] %v469
    %485 = vst [vmem:[#allocation8 + $0x36] sm:$0x1] %v470
    %486 = vst [vmem:[#allocation8 + $0x46] sm:$0x1] %v471
    %487 = vst [vmem:[#allocation8 + $0x56] sm:$0x1] %v472
    %488 = vst [vmem:[#allocation8 + $0x66] sm:$0x1] %v473
    %489 = vst [vmem:[#allocation8 + $0x76] sm:$0x1] %v474
    %s490 = scalar_lea.vmem [#allocation3], 56
    %v491 = vld [vmem:[%s490] sm:$0xff]
    %v492 = vld [vmem:[#allocation6] sm:$0xff]
    %v493 = vld [vmem:[#allocation6 + $0x8] sm:$0xff]
    %v494 = vld [vmem:[#allocation6 + $0x10] sm:$0xff]
    %v495 = vld [vmem:[#allocation6 + $0x18] sm:$0xff]
    %v496 = vld [vmem:[#allocation6 + $0x20] sm:$0xff]
    %v497 = vld [vmem:[#allocation6 + $0x28] sm:$0xff]
    %v498 = vld [vmem:[#allocation6 + $0x30] sm:$0xff]
    %v499 = vld [vmem:[#allocation6 + $0x38] sm:$0xff]
    %v500 = vld [vmem:[#allocation6 + $0x40] sm:$0xff]
    %v501 = vld [vmem:[#allocation6 + $0x48] sm:$0xff]
    %v502 = vld [vmem:[#allocation6 + $0x50] sm:$0xff]
    %v503 = vld [vmem:[#allocation6 + $0x58] sm:$0xff]
    %v504 = vld [vmem:[#allocation6 + $0x60] sm:$0xff]
    %v505 = vld [vmem:[#allocation6 + $0x68] sm:$0xff]
    %v506 = vld [vmem:[#allocation6 + $0x70] sm:$0xff]
    %v507 = vld [vmem:[#allocation6 + $0x78] sm:$0xff]
    %508 = vmatpush.msra.mxu0 %v507
    %509 = vmatpush.msra.mxu0 %v506
    %510 = vmatpush.msra.mxu0 %v505
    %511 = vmatpush.msra.mxu0 %v504
    %512 = vmatpush.msra.mxu0 %v503
    %513 = vmatpush.msra.mxu0 %v502
    %514 = vmatpush.msra.mxu0 %v501
    %515 = vmatpush.msra.mxu0 %v500
    %516 = vmatpush.msra.mxu0 %v499
    %517 = vmatpush.msra.mxu0 %v498
    %518 = vmatpush.msra.mxu0 %v497
    %519 = vmatpush.msra.mxu0 %v496
    %520 = vmatpush.msra.mxu0 %v495
    %521 = vmatpush.msra.mxu0 %v494
    %522 = vmatpush.msra.mxu0 %v493
    %523 = vmatpush.msra.mxu0 %v492
    %524 = vmatmul.f32.gmra.mxu0 %v466
    %v525 = vpop.f32.mrf.mxu0
    %v526 = vadd.f32 0.0, %v525
    %527 = vdwg.mxu0
    %v528 = vadd.f32 %v491, %v526
    %v529 = vtanh.pop %v528
    %v531 = vrot.slane %v529, 1
    %v532 = vrot.slane %v529, 2
    %v533 = vrot.slane %v529, 3
    %v534 = vrot.slane %v529, 4
    %v535 = vrot.slane %v529, 5
    %v536 = vrot.slane %v529, 6
    %v537 = vrot.slane %v529, 7
    %545 = vst [vmem:[#allocation8 + $0x7] sm:$0x1] %v529
    %546 = vst [vmem:[#allocation8 + $0x17] sm:$0x1] %v531
    %547 = vst [vmem:[#allocation8 + $0x27] sm:$0x1] %v532
    %548 = vst [vmem:[#allocation8 + $0x37] sm:$0x1] %v533
    %549 = vst [vmem:[#allocation8 + $0x47] sm:$0x1] %v534
    %550 = vst [vmem:[#allocation8 + $0x57] sm:$0x1] %v535
    %551 = vst [vmem:[#allocation8 + $0x67] sm:$0x1] %v536
    %552 = vst [vmem:[#allocation8 + $0x77] sm:$0x1] %v537
    %s553 = scalar_lea.vmem [#allocation3], 64
    %v554 = vld [vmem:[%s553] sm:$0xff]
    %v555 = vld [vmem:[#allocation6] sm:$0xff]
    %v556 = vld [vmem:[#allocation6 + $0x8] sm:$0xff]
    %v557 = vld [vmem:[#allocation6 + $0x10] sm:$0xff]
    %v558 = vld [vmem:[#allocation6 + $0x18] sm:$0xff]
    %v559 = vld [vmem:[#allocation6 + $0x20] sm:$0xff]
    %v560 = vld [vmem:[#allocation6 + $0x28] sm:$0xff]
    %v561 = vld [vmem:[#allocation6 + $0x30] sm:$0xff]
    %v562 = vld [vmem:[#allocation6 + $0x38] sm:$0xff]
    %v563 = vld [vmem:[#allocation6 + $0x40] sm:$0xff]
    %v564 = vld [vmem:[#allocation6 + $0x48] sm:$0xff]
    %v565 = vld [vmem:[#allocation6 + $0x50] sm:$0xff]
    %v566 = vld [vmem:[#allocation6 + $0x58] sm:$0xff]
    %v567 = vld [vmem:[#allocation6 + $0x60] sm:$0xff]
    %v568 = vld [vmem:[#allocation6 + $0x68] sm:$0xff]
    %v569 = vld [vmem:[#allocation6 + $0x70] sm:$0xff]
    %v570 = vld [vmem:[#allocation6 + $0x78] sm:$0xff]
    %571 = vmatpush.msra.mxu0 %v570
    %572 = vmatpush.msra.mxu0 %v569
    %573 = vmatpush.msra.mxu0 %v568
    %574 = vmatpush.msra.mxu0 %v567
    %575 = vmatpush.msra.mxu0 %v566
    %576 = vmatpush.msra.mxu0 %v565
    %577 = vmatpush.msra.mxu0 %v564
    %578 = vmatpush.msra.mxu0 %v563
    %579 = vmatpush.msra.mxu0 %v562
    %580 = vmatpush.msra.mxu0 %v561
    %581 = vmatpush.msra.mxu0 %v560
    %582 = vmatpush.msra.mxu0 %v559
    %583 = vmatpush.msra.mxu0 %v558
    %584 = vmatpush.msra.mxu0 %v557
    %585 = vmatpush.msra.mxu0 %v556
    %586 = vmatpush.msra.mxu0 %v555
    %587 = vmatmul.f32.gmra.mxu0 %v529
    %v588 = vpop.f32.mrf.mxu0
    %v589 = vadd.f32 0.0, %v588
    %590 = vdwg.mxu0
    %v591 = vadd.f32 %v554, %v589
    %v592 = vtanh.pop %v591
    %v594 = vrot.slane %v592, 1
    %v595 = vrot.slane %v592, 2
    %v596 = vrot.slane %v592, 3
    %v597 = vrot.slane %v592, 4
    %v598 = vrot.slane %v592, 5
    %v599 = vrot.slane %v592, 6
    %v600 = vrot.slane %v592, 7
    %608 = vst [vmem:[#allocation8 + $0x8] sm:$0x1] %v592
    %609 = vst [vmem:[#allocation8 + $0x18] sm:$0x1] %v594
    %610 = vst [vmem:[#allocation8 + $0x28] sm:$0x1] %v595
    %611 = vst [vmem:[#allocation8 + $0x38] sm:$0x1] %v596
    %612 = vst [vmem:[#allocation8 + $0x48] sm:$0x1] %v597
    %613 = vst [vmem:[#allocation8 + $0x58] sm:$0x1] %v598
    %614 = vst [vmem:[#allocation8 + $0x68] sm:$0x1] %v599
    %615 = vst [vmem:[#allocation8 + $0x78] sm:$0x1] %v600
    %s616 = scalar_lea.vmem [#allocation3], 72
    %v617 = vld [vmem:[%s616] sm:$0xff]
    %v618 = vld [vmem:[#allocation6] sm:$0xff]
    %v619 = vld [vmem:[#allocation6 + $0x8] sm:$0xff]
    %v620 = vld [vmem:[#allocation6 + $0x10] sm:$0xff]
    %v621 = vld [vmem:[#allocation6 + $0x18] sm:$0xff]
    %v622 = vld [vmem:[#allocation6 + $0x20] sm:$0xff]
    %v623 = vld [vmem:[#allocation6 + $0x28] sm:$0xff]
    %v624 = vld [vmem:[#allocation6 + $0x30] sm:$0xff]
    %v625 = vld [vmem:[#allocation6 + $0x38] sm:$0xff]
    %v626 = vld [vmem:[#allocation6 + $0x40] sm:$0xff]
    %v627 = vld [vmem:[#allocation6 + $0x48] sm:$0xff]
    %v628 = vld [vmem:[#allocation6 + $0x50] sm:$0xff]
    %v629 = vld [vmem:[#allocation6 + $0x58] sm:$0xff]
    %v630 = vld [vmem:[#allocation6 + $0x60] sm:$0xff]
    %v631 = vld [vmem:[#allocation6 + $0x68] sm:$0xff]
    %v632 = vld [vmem:[#allocation6 + $0x70] sm:$0xff]
    %v633 = vld [vmem:[#allocation6 + $0x78] sm:$0xff]
    %634 = vmatpush.msra.mxu0 %v633
    %635 = vmatpush.msra.mxu0 %v632
    %636 = vmatpush.msra.mxu0 %v631
    %637 = vmatpush.msra.mxu0 %v630
    %638 = vmatpush.msra.mxu0 %v629
    %639 = vmatpush.msra.mxu0 %v628
    %640 = vmatpush.msra.mxu0 %v627
    %641 = vmatpush.msra.mxu0 %v626
    %642 = vmatpush.msra.mxu0 %v625
    %643 = vmatpush.msra.mxu0 %v624
    %644 = vmatpush.msra.mxu0 %v623
    %645 = vmatpush.msra.mxu0 %v622
    %646 = vmatpush.msra.mxu0 %v621
    %647 = vmatpush.msra.mxu0 %v620
    %648 = vmatpush.msra.mxu0 %v619
    %649 = vmatpush.msra.mxu0 %v618
    %650 = vmatmul.f32.gmra.mxu0 %v592
    %v651 = vpop.f32.mrf.mxu0
    %v652 = vadd.f32 0.0, %v651
    %653 = vdwg.mxu0
    %v654 = vadd.f32 %v617, %v652
    %v655 = vtanh.pop %v654
    %v657 = vrot.slane %v655, 1
    %v658 = vrot.slane %v655, 2
    %v659 = vrot.slane %v655, 3
    %v660 = vrot.slane %v655, 4
    %v661 = vrot.slane %v655, 5
    %v662 = vrot.slane %v655, 6
    %v663 = vrot.slane %v655, 7
    %671 = vst [vmem:[#allocation8 + $0x9] sm:$0x1] %v655
    %672 = vst [vmem:[#allocation8 + $0x19] sm:$0x1] %v657
    %673 = vst [vmem:[#allocation8 + $0x29] sm:$0x1] %v658
    %674 = vst [vmem:[#allocation8 + $0x39] sm:$0x1] %v659
    %675 = vst [vmem:[#allocation8 + $0x49] sm:$0x1] %v660
    %676 = vst [vmem:[#allocation8 + $0x59] sm:$0x1] %v661
    %677 = vst [vmem:[#allocation8 + $0x69] sm:$0x1] %v662
    %678 = vst [vmem:[#allocation8 + $0x79] sm:$0x1] %v663
    %s679 = scalar_lea.vmem [#allocation3], 80
    %v680 = vld [vmem:[%s679] sm:$0xff]
    %v681 = vld [vmem:[#allocation6] sm:$0xff]
    %v682 = vld [vmem:[#allocation6 + $0x8] sm:$0xff]
    %v683 = vld [vmem:[#allocation6 + $0x10] sm:$0xff]
    %v684 = vld [vmem:[#allocation6 + $0x18] sm:$0xff]
    %v685 = vld [vmem:[#allocation6 + $0x20] sm:$0xff]
    %v686 = vld [vmem:[#allocation6 + $0x28] sm:$0xff]
    %v687 = vld [vmem:[#allocation6 + $0x30] sm:$0xff]
    %v688 = vld [vmem:[#allocation6 + $0x38] sm:$0xff]
    %v689 = vld [vmem:[#allocation6 + $0x40] sm:$0xff]
    %v690 = vld [vmem:[#allocation6 + $0x48] sm:$0xff]
    %v691 = vld [vmem:[#allocation6 + $0x50] sm:$0xff]
    %v692 = vld [vmem:[#allocation6 + $0x58] sm:$0xff]
    %v693 = vld [vmem:[#allocation6 + $0x60] sm:$0xff]
    %v694 = vld [vmem:[#allocation6 + $0x68] sm:$0xff]
    %v695 = vld [vmem:[#allocation6 + $0x70] sm:$0xff]
    %v696 = vld [vmem:[#allocation6 + $0x78] sm:$0xff]
    %697 = vmatpush.msra.mxu0 %v696
    %698 = vmatpush.msra.mxu0 %v695
    %699 = vmatpush.msra.mxu0 %v694
    %700 = vmatpush.msra.mxu0 %v693
    %701 = vmatpush.msra.mxu0 %v692
    %702 = vmatpush.msra.mxu0 %v691
    %703 = vmatpush.msra.mxu0 %v690
    %704 = vmatpush.msra.mxu0 %v689
    %705 = vmatpush.msra.mxu0 %v688
    %706 = vmatpush.msra.mxu0 %v687
    %707 = vmatpush.msra.mxu0 %v686
    %708 = vmatpush.msra.mxu0 %v685
    %709 = vmatpush.msra.mxu0 %v684
    %710 = vmatpush.msra.mxu0 %v683
    %711 = vmatpush.msra.mxu0 %v682
    %712 = vmatpush.msra.mxu0 %v681
    %713 = vmatmul.f32.gmra.mxu0 %v655
    %v714 = vpop.f32.mrf.mxu0
    %v715 = vadd.f32 0.0, %v714
    %716 = vdwg.mxu0
    %v717 = vadd.f32 %v680, %v715
    %v718 = vtanh.pop %v717
    %v720 = vrot.slane %v718, 1
    %v721 = vrot.slane %v718, 2
    %v722 = vrot.slane %v718, 3
    %v723 = vrot.slane %v718, 4
    %v724 = vrot.slane %v718, 5
    %v725 = vrot.slane %v718, 6
    %v726 = vrot.slane %v718, 7
    %734 = vst [vmem:[#allocation8 + $0xa] sm:$0x1] %v718
    %735 = vst [vmem:[#allocation8 + $0x1a] sm:$0x1] %v720
    %736 = vst [vmem:[#allocation8 + $0x2a] sm:$0x1] %v721
    %737 = vst [vmem:[#allocation8 + $0x3a] sm:$0x1] %v722
    %738 = vst [vmem:[#allocation8 + $0x4a] sm:$0x1] %v723
    %739 = vst [vmem:[#allocation8 + $0x5a] sm:$0x1] %v724
    %740 = vst [vmem:[#allocation8 + $0x6a] sm:$0x1] %v725
    %741 = vst [vmem:[#allocation8 + $0x7a] sm:$0x1] %v726
    %s742 = scalar_lea.vmem [#allocation3], 88
    %v743 = vld [vmem:[%s742] sm:$0xff]
    %v744 = vld [vmem:[#allocation6] sm:$0xff]
    %v745 = vld [vmem:[#allocation6 + $0x8] sm:$0xff]
    %v746 = vld [vmem:[#allocation6 + $0x10] sm:$0xff]
    %v747 = vld [vmem:[#allocation6 + $0x18] sm:$0xff]
    %v748 = vld [vmem:[#allocation6 + $0x20] sm:$0xff]
    %v749 = vld [vmem:[#allocation6 + $0x28] sm:$0xff]
    %v750 = vld [vmem:[#allocation6 + $0x30] sm:$0xff]
    %v751 = vld [vmem:[#allocation6 + $0x38] sm:$0xff]
    %v752 = vld [vmem:[#allocation6 + $0x40] sm:$0xff]
    %v753 = vld [vmem:[#allocation6 + $0x48] sm:$0xff]
    %v754 = vld [vmem:[#allocation6 + $0x50] sm:$0xff]
    %v755 = vld [vmem:[#allocation6 + $0x58] sm:$0xff]
    %v756 = vld [vmem:[#allocation6 + $0x60] sm:$0xff]
    %v757 = vld [vmem:[#allocation6 + $0x68] sm:$0xff]
    %v758 = vld [vmem:[#allocation6 + $0x70] sm:$0xff]
    %v759 = vld [vmem:[#allocation6 + $0x78] sm:$0xff]
    %760 = vmatpush.msra.mxu0 %v759
    %761 = vmatpush.msra.mxu0 %v758
    %762 = vmatpush.msra.mxu0 %v757
    %763 = vmatpush.msra.mxu0 %v756
    %764 = vmatpush.msra.mxu0 %v755
    %765 = vmatpush.msra.mxu0 %v754
    %766 = vmatpush.msra.mxu0 %v753
    %767 = vmatpush.msra.mxu0 %v752
    %768 = vmatpush.msra.mxu0 %v751
    %769 = vmatpush.msra.mxu0 %v750
    %770 = vmatpush.msra.mxu0 %v749
    %771 = vmatpush.msra.mxu0 %v748
    %772 = vmatpush.msra.mxu0 %v747
    %773 = vmatpush.msra.mxu0 %v746
    %774 = vmatpush.msra.mxu0 %v745
    %775 = vmatpush.msra.mxu0 %v744
    %776 = vmatmul.f32.gmra.mxu0 %v718
    %v777 = vpop.f32.mrf.mxu0
    %v778 = vadd.f32 0.0, %v777
    %779 = vdwg.mxu0
    %v780 = vadd.f32 %v743, %v778
    %v781 = vtanh.pop %v780
    %v783 = vrot.slane %v781, 1
    %v784 = vrot.slane %v781, 2
    %v785 = vrot.slane %v781, 3
    %v786 = vrot.slane %v781, 4
    %v787 = vrot.slane %v781, 5
    %v788 = vrot.slane %v781, 6
    %v789 = vrot.slane %v781, 7
    %797 = vst [vmem:[#allocation8 + $0xb] sm:$0x1] %v781
    %798 = vst [vmem:[#allocation8 + $0x1b] sm:$0x1] %v783
    %799 = vst [vmem:[#allocation8 + $0x2b] sm:$0x1] %v784
    %800 = vst [vmem:[#allocation8 + $0x3b] sm:$0x1] %v785
    %801 = vst [vmem:[#allocation8 + $0x4b] sm:$0x1] %v786
    %802 = vst [vmem:[#allocation8 + $0x5b] sm:$0x1] %v787
    %803 = vst [vmem:[#allocation8 + $0x6b] sm:$0x1] %v788
    %804 = vst [vmem:[#allocation8 + $0x7b] sm:$0x1] %v789
    %s805 = scalar_lea.vmem [#allocation3], 96
    %v806 = vld [vmem:[%s805] sm:$0xff]
    %v807 = vld [vmem:[#allocation6] sm:$0xff]
    %v808 = vld [vmem:[#allocation6 + $0x8] sm:$0xff]
    %v809 = vld [vmem:[#allocation6 + $0x10] sm:$0xff]
    %v810 = vld [vmem:[#allocation6 + $0x18] sm:$0xff]
    %v811 = vld [vmem:[#allocation6 + $0x20] sm:$0xff]
    %v812 = vld [vmem:[#allocation6 + $0x28] sm:$0xff]
    %v813 = vld [vmem:[#allocation6 + $0x30] sm:$0xff]
    %v814 = vld [vmem:[#allocation6 + $0x38] sm:$0xff]
    %v815 = vld [vmem:[#allocation6 + $0x40] sm:$0xff]
    %v816 = vld [vmem:[#allocation6 + $0x48] sm:$0xff]
    %v817 = vld [vmem:[#allocation6 + $0x50] sm:$0xff]
    %v818 = vld [vmem:[#allocation6 + $0x58] sm:$0xff]
    %v819 = vld [vmem:[#allocation6 + $0x60] sm:$0xff]
    %v820 = vld [vmem:[#allocation6 + $0x68] sm:$0xff]
    %v821 = vld [vmem:[#allocation6 + $0x70] sm:$0xff]
    %v822 = vld [vmem:[#allocation6 + $0x78] sm:$0xff]
    %823 = vmatpush.msra.mxu0 %v822
    %824 = vmatpush.msra.mxu0 %v821
    %825 = vmatpush.msra.mxu0 %v820
    %826 = vmatpush.msra.mxu0 %v819
    %827 = vmatpush.msra.mxu0 %v818
    %828 = vmatpush.msra.mxu0 %v817
    %829 = vmatpush.msra.mxu0 %v816
    %830 = vmatpush.msra.mxu0 %v815
    %831 = vmatpush.msra.mxu0 %v814
    %832 = vmatpush.msra.mxu0 %v813
    %833 = vmatpush.msra.mxu0 %v812
    %834 = vmatpush.msra.mxu0 %v811
    %835 = vmatpush.msra.mxu0 %v810
    %836 = vmatpush.msra.mxu0 %v809
    %837 = vmatpush.msra.mxu0 %v808
    %838 = vmatpush.msra.mxu0 %v807
    %839 = vmatmul.f32.gmra.mxu0 %v781
    %v840 = vpop.f32.mrf.mxu0
    %v841 = vadd.f32 0.0, %v840
    %842 = vdwg.mxu0
    %v843 = vadd.f32 %v806, %v841
    %v844 = vtanh.pop %v843
    %v846 = vrot.slane %v844, 1
    %v847 = vrot.slane %v844, 2
    %v848 = vrot.slane %v844, 3
    %v849 = vrot.slane %v844, 4
    %v850 = vrot.slane %v844, 5
    %v851 = vrot.slane %v844, 6
    %v852 = vrot.slane %v844, 7
    %860 = vst [vmem:[#allocation8 + $0xc] sm:$0x1] %v844
    %861 = vst [vmem:[#allocation8 + $0x1c] sm:$0x1] %v846
    %862 = vst [vmem:[#allocation8 + $0x2c] sm:$0x1] %v847
    %863 = vst [vmem:[#allocation8 + $0x3c] sm:$0x1] %v848
    %864 = vst [vmem:[#allocation8 + $0x4c] sm:$0x1] %v849
    %865 = vst [vmem:[#allocation8 + $0x5c] sm:$0x1] %v850
    %866 = vst [vmem:[#allocation8 + $0x6c] sm:$0x1] %v851
    %867 = vst [vmem:[#allocation8 + $0x7c] sm:$0x1] %v852
    %s868 = scalar_lea.vmem [#allocation3], 104
    %v869 = vld [vmem:[%s868] sm:$0xff]
    %v870 = vld [vmem:[#allocation6] sm:$0xff]
    %v871 = vld [vmem:[#allocation6 + $0x8] sm:$0xff]
    %v872 = vld [vmem:[#allocation6 + $0x10] sm:$0xff]
    %v873 = vld [vmem:[#allocation6 + $0x18] sm:$0xff]
    %v874 = vld [vmem:[#allocation6 + $0x20] sm:$0xff]
    %v875 = vld [vmem:[#allocation6 + $0x28] sm:$0xff]
    %v876 = vld [vmem:[#allocation6 + $0x30] sm:$0xff]
    %v877 = vld [vmem:[#allocation6 + $0x38] sm:$0xff]
    %v878 = vld [vmem:[#allocation6 + $0x40] sm:$0xff]
    %v879 = vld [vmem:[#allocation6 + $0x48] sm:$0xff]
    %v880 = vld [vmem:[#allocation6 + $0x50] sm:$0xff]
    %v881 = vld [vmem:[#allocation6 + $0x58] sm:$0xff]
    %v882 = vld [vmem:[#allocation6 + $0x60] sm:$0xff]
    %v883 = vld [vmem:[#allocation6 + $0x68] sm:$0xff]
    %v884 = vld [vmem:[#allocation6 + $0x70] sm:$0xff]
    %v885 = vld [vmem:[#allocation6 + $0x78] sm:$0xff]
    %886 = vmatpush.msra.mxu0 %v885
    %887 = vmatpush.msra.mxu0 %v884
    %888 = vmatpush.msra.mxu0 %v883
    %889 = vmatpush.msra.mxu0 %v882
    %890 = vmatpush.msra.mxu0 %v881
    %891 = vmatpush.msra.mxu0 %v880
    %892 = vmatpush.msra.mxu0 %v879
    %893 = vmatpush.msra.mxu0 %v878
    %894 = vmatpush.msra.mxu0 %v877
    %895 = vmatpush.msra.mxu0 %v876
    %896 = vmatpush.msra.mxu0 %v875
    %897 = vmatpush.msra.mxu0 %v874
    %898 = vmatpush.msra.mxu0 %v873
    %899 = vmatpush.msra.mxu0 %v872
    %900 = vmatpush.msra.mxu0 %v871
    %901 = vmatpush.msra.mxu0 %v870
    %902 = vmatmul.f32.gmra.mxu0 %v844
    %v903 = vpop.f32.mrf.mxu0
    %v904 = vadd.f32 0.0, %v903
    %905 = vdwg.mxu0
    %v906 = vadd.f32 %v869, %v904
    %v907 = vtanh.pop %v906
    %v909 = vrot.slane %v907, 1
    %v910 = vrot.slane %v907, 2
    %v911 = vrot.slane %v907, 3
    %v912 = vrot.slane %v907, 4
    %v913 = vrot.slane %v907, 5
    %v914 = vrot.slane %v907, 6
    %v915 = vrot.slane %v907, 7
    %923 = vst [vmem:[#allocation8 + $0xd] sm:$0x1] %v907
    %924 = vst [vmem:[#allocation8 + $0x1d] sm:$0x1] %v909
    %925 = vst [vmem:[#allocation8 + $0x2d] sm:$0x1] %v910
    %926 = vst [vmem:[#allocation8 + $0x3d] sm:$0x1] %v911
    %927 = vst [vmem:[#allocation8 + $0x4d] sm:$0x1] %v912
    %928 = vst [vmem:[#allocation8 + $0x5d] sm:$0x1] %v913
    %929 = vst [vmem:[#allocation8 + $0x6d] sm:$0x1] %v914
    %930 = vst [vmem:[#allocation8 + $0x7d] sm:$0x1] %v915
    %s931 = scalar_lea.vmem [#allocation3], 112
    %v932 = vld [vmem:[%s931] sm:$0xff]
    %v933 = vld [vmem:[#allocation6] sm:$0xff]
    %v934 = vld [vmem:[#allocation6 + $0x8] sm:$0xff]
    %v935 = vld [vmem:[#allocation6 + $0x10] sm:$0xff]
    %v936 = vld [vmem:[#allocation6 + $0x18] sm:$0xff]
    %v937 = vld [vmem:[#allocation6 + $0x20] sm:$0xff]
    %v938 = vld [vmem:[#allocation6 + $0x28] sm:$0xff]
    %v939 = vld [vmem:[#allocation6 + $0x30] sm:$0xff]
    %v940 = vld [vmem:[#allocation6 + $0x38] sm:$0xff]
    %v941 = vld [vmem:[#allocation6 + $0x40] sm:$0xff]
    %v942 = vld [vmem:[#allocation6 + $0x48] sm:$0xff]
    %v943 = vld [vmem:[#allocation6 + $0x50] sm:$0xff]
    %v944 = vld [vmem:[#allocation6 + $0x58] sm:$0xff]
    %v945 = vld [vmem:[#allocation6 + $0x60] sm:$0xff]
    %v946 = vld [vmem:[#allocation6 + $0x68] sm:$0xff]
    %v947 = vld [vmem:[#allocation6 + $0x70] sm:$0xff]
    %v948 = vld [vmem:[#allocation6 + $0x78] sm:$0xff]
    %949 = vmatpush.msra.mxu0 %v948
    %950 = vmatpush.msra.mxu0 %v947
    %951 = vmatpush.msra.mxu0 %v946
    %952 = vmatpush.msra.mxu0 %v945
    %953 = vmatpush.msra.mxu0 %v944
    %954 = vmatpush.msra.mxu0 %v943
    %955 = vmatpush.msra.mxu0 %v942
    %956 = vmatpush.msra.mxu0 %v941
    %957 = vmatpush.msra.mxu0 %v940
    %958 = vmatpush.msra.mxu0 %v939
    %959 = vmatpush.msra.mxu0 %v938
    %960 = vmatpush.msra.mxu0 %v937
    %961 = vmatpush.msra.mxu0 %v936
    %962 = vmatpush.msra.mxu0 %v935
    %963 = vmatpush.msra.mxu0 %v934
    %964 = vmatpush.msra.mxu0 %v933
    %965 = vmatmul.f32.gmra.mxu0 %v907
    %v966 = vpop.f32.mrf.mxu0
    %v967 = vadd.f32 0.0, %v966
    %968 = vdwg.mxu0
    %v969 = vadd.f32 %v932, %v967
    %v970 = vtanh.pop %v969
    %v972 = vrot.slane %v970, 1
    %v973 = vrot.slane %v970, 2
    %v974 = vrot.slane %v970, 3
    %v975 = vrot.slane %v970, 4
    %v976 = vrot.slane %v970, 5
    %v977 = vrot.slane %v970, 6
    %v978 = vrot.slane %v970, 7
    %986 = vst [vmem:[#allocation8 + $0xe] sm:$0x1] %v970
    %987 = vst [vmem:[#allocation8 + $0x1e] sm:$0x1] %v972
    %988 = vst [vmem:[#allocation8 + $0x2e] sm:$0x1] %v973
    %989 = vst [vmem:[#allocation8 + $0x3e] sm:$0x1] %v974
    %990 = vst [vmem:[#allocation8 + $0x4e] sm:$0x1] %v975
    %991 = vst [vmem:[#allocation8 + $0x5e] sm:$0x1] %v976
    %992 = vst [vmem:[#allocation8 + $0x6e] sm:$0x1] %v977
    %993 = vst [vmem:[#allocation8 + $0x7e] sm:$0x1] %v978
    %s994 = scalar_lea.vmem [#allocation3], 120
    %v995 = vld [vmem:[%s994] sm:$0xff]
    %v996 = vld [vmem:[#allocation6] sm:$0xff]
    %v997 = vld [vmem:[#allocation6 + $0x8] sm:$0xff]
    %v998 = vld [vmem:[#allocation6 + $0x10] sm:$0xff]
    %v999 = vld [vmem:[#allocation6 + $0x18] sm:$0xff]
    %v1000 = vld [vmem:[#allocation6 + $0x20] sm:$0xff]
    %v1001 = vld [vmem:[#allocation6 + $0x28] sm:$0xff]
    %v1002 = vld [vmem:[#allocation6 + $0x30] sm:$0xff]
    %v1003 = vld [vmem:[#allocation6 + $0x38] sm:$0xff]
    %v1004 = vld [vmem:[#allocation6 + $0x40] sm:$0xff]
    %v1005 = vld [vmem:[#allocation6 + $0x48] sm:$0xff]
    %v1006 = vld [vmem:[#allocation6 + $0x50] sm:$0xff]
    %v1007 = vld [vmem:[#allocation6 + $0x58] sm:$0xff]
    %v1008 = vld [vmem:[#allocation6 + $0x60] sm:$0xff]
    %v1009 = vld [vmem:[#allocation6 + $0x68] sm:$0xff]
    %v1010 = vld [vmem:[#allocation6 + $0x70] sm:$0xff]
    %v1011 = vld [vmem:[#allocation6 + $0x78] sm:$0xff]
    %1012 = vmatpush.msra.mxu0 %v1011
    %1013 = vmatpush.msra.mxu0 %v1010
    %1014 = vmatpush.msra.mxu0 %v1009
    %1015 = vmatpush.msra.mxu0 %v1008
    %1016 = vmatpush.msra.mxu0 %v1007
    %1017 = vmatpush.msra.mxu0 %v1006
    %1018 = vmatpush.msra.mxu0 %v1005
    %1019 = vmatpush.msra.mxu0 %v1004
    %1020 = vmatpush.msra.mxu0 %v1003
    %1021 = vmatpush.msra.mxu0 %v1002
    %1022 = vmatpush.msra.mxu0 %v1001
    %1023 = vmatpush.msra.mxu0 %v1000
    %1024 = vmatpush.msra.mxu0 %v999
    %1025 = vmatpush.msra.mxu0 %v998
    %1026 = vmatpush.msra.mxu0 %v997
    %1027 = vmatpush.msra.mxu0 %v996
    %1028 = vmatmul.f32.gmra.mxu0 %v970
    %v1029 = vpop.f32.mrf.mxu0
    %v1030 = vadd.f32 0.0, %v1029
    %1031 = vdwg.mxu0
    %v1032 = vadd.f32 %v995, %v1030
    %v1033 = vtanh.pop %v1032
    %v1035 = vrot.slane %v1033, 1
    %v1036 = vrot.slane %v1033, 2
    %v1037 = vrot.slane %v1033, 3
    %v1038 = vrot.slane %v1033, 4
    %v1039 = vrot.slane %v1033, 5
    %v1040 = vrot.slane %v1033, 6
    %v1041 = vrot.slane %v1033, 7
    %1049 = vst [vmem:[#allocation8 + $0xf] sm:$0x1] %v1033
    %1050 = vst [vmem:[#allocation8 + $0x1f] sm:$0x1] %v1035
    %1051 = vst [vmem:[#allocation8 + $0x2f] sm:$0x1] %v1036
    %1052 = vst [vmem:[#allocation8 + $0x3f] sm:$0x1] %v1037
    %1053 = vst [vmem:[#allocation8 + $0x4f] sm:$0x1] %v1038
    %1054 = vst [vmem:[#allocation8 + $0x5f] sm:$0x1] %v1039
    %1055 = vst [vmem:[#allocation8 + $0x6f] sm:$0x1] %v1040
    %1056 = vst [vmem:[#allocation8 + $0x7f] sm:$0x1] %v1041
    %1057 = vst [vmem:[#allocation2] sm:$0xff] %v1033
    // Predicated region
    $region22: #{tpu_custom_call.1} parent=1 // pred_check
      _
    $region23: #{tpu_custom_call.1} parent=1 // pred_check_branch
      %1059 = sbr.rel (0) target = $region25
    $region24: #{tpu_custom_call.1} parent=1 // pred_region
      %1061 = vsyncadd [#allocation5], 0
      %s1062 = sshll.u32 [#allocation8], 4
      %s1063 = int_to_ptr.vmem [resolvable:$true] %s1062
      %s1064 = sshll.u32 %s2, 4
      %s1065 = int_to_ptr.hbm [resolvable:$true] %s1064
      %1070 = dma.vmem_to_hbm [thread:$0]  %s1063, 2048, %s1065, [#allocation5], 128, 128, 8
    $region25: #{tpu_custom_call.1} parent=1 // pred_fallthru
      _
    // Predicated region
    $region26: #{tpu_custom_call.1} parent=1 // pred_check
      _
    $region27: #{tpu_custom_call.1} parent=1 // pred_check_branch
      %1072 = sbr.rel (0) target = $region29
    $region28: #{tpu_custom_call.1} parent=1 // pred_region
      %1074 = dma.done [#allocation5], 2048
    $region29: #{tpu_custom_call.1} parent=1 // pred_fallthru
      _
    %1075 = vsyncpa [#allocation4], 1
    %1076 = vsyncpa [#allocation7], 1
    %1077 = vsyncpa [#allocation5], 1

</llo_original>
